<compile_context>
chip_gen: v6e
topology: v6e:2x2x1
jax: 0.10.0
libtpu: 0.0.40
codegen_flags: <defaults>
</compile_context>

<pallas_src>
import numpy as np
import jax
import jax.numpy as jnp
from jax.experimental import pallas as pl
from jax.experimental.pallas import tpu as pltpu


def _round_up(x, m):
    return (x + m - 1) // m * m


# ----------------------------- Pallas kernel --------------------------------
def _make_block_kernel(Z, P, Kp, N, eps):
    ZP = Z * P

    def kernel(x_ref, w_ref, b_ref, gamma_ref, beta_ref,
               gsum_ref, gbcast_ref, scale_ref, shift_ref, o_ref):
        # ---- Conv3d(k=3, pad=1): 3 block-Toeplitz matmuls (phi & r folded) --
        acc = jnp.zeros((ZP, N), jnp.float32)
        for kz in range(3):
            # kz-slice is on the outermost dim; P % 8 == 0 makes the reshape a
            # no-op relayout.  Operands already bf16 -> native MXU path.
            lhs = x_ref[0, kz:kz + Z].reshape(ZP, Kp)
            acc = acc + jnp.dot(lhs, w_ref[kz],
                                preferred_element_type=jnp.float32)

        # ---- GroupNorm stats (bias folded algebraically, factored mixer) ----
        b_row = b_ref[...]                                       # (1, N)
        col_sum = jnp.sum(acc, axis=0, keepdims=True)            # (1, N)
        col_sq = jnp.sum(acc * acc, axis=0, keepdims=True)       # (1, N)
        s1 = col_sum + float(ZP) * b_row                         # sum of (acc+b)
        s2 = col_sq + 2.0 * b_row * col_sum + float(ZP) * b_row * b_row
        mean = jnp.dot(jnp.dot(s1, gsum_ref[...],
                               preferred_element_type=jnp.float32),
                       gbcast_ref[...], preferred_element_type=jnp.float32)
        ex2 = jnp.dot(jnp.dot(s2, gsum_ref[...],
                              preferred_element_type=jnp.float32),
                      gbcast_ref[...], preferred_element_type=jnp.float32)
        var = jnp.maximum(ex2 - mean * mean, 0.0)                # clamp cancellation
        inv = jax.lax.rsqrt(var + eps)

        # ---- fold GN affine + FiLM + bias into per-lane scale/shift rows ----
        film = scale_ref[0] + 1.0                                # (1, N)
        eff_scale = inv * gamma_ref[...] * film
        eff_shift = (b_row - mean) * eff_scale + beta_ref[...] * film + shift_ref[0]
        y = acc * eff_scale + eff_shift                          # single FMA pass

        # ---- SiLU (reciprocal on the EUP slot) ------------------------------
        y = y * pl.reciprocal(1.0 + jnp.exp(-y), approx=True)

        o_ref[0] = y

    return kernel


# ----------------------------- parameter setup ------------------------------
def init_block_params(key, dim_in, dim_out, kernel_size=3):
    """PyTorch-style init for Conv3d + GroupNorm affine."""
    kw, kb, kg, kbe = jax.random.split(key, 4)
    fan_in = dim_in * kernel_size ** 3
    bound = 1.0 / np.sqrt(fan_in)
    w = jax.random.uniform(kw, (dim_out, dim_in) + (kernel_size,) * 3,
                           jnp.float32, -bound, bound)
    b = jax.random.uniform(kb, (dim_out,), jnp.float32, -bound, bound)
    gamma = jax.random.uniform(kg, (dim_out,), jnp.float32, 0.5, 1.5)
    beta = jax.random.uniform(kbe, (dim_out,), jnp.float32, -0.5, 0.5)
    return dict(w=w, b=b, gamma=gamma, beta=beta)


def prepare_block_params(params, spatial, groups):
    """One-time layout prep: per-kz block-Toeplitz conv weights (phi taps and
    r-convolution folded into K, bf16), tiled affine rows, and the factored
    GroupNorm group-sum / broadcast matrices."""
    Z, P, R = spatial
    w = params["w"]
    C_out, C_in = int(w.shape[0]), int(w.shape[1])
    Rp = R + 2
    Kr = Rp * C_in
    K3 = 3 * Kr
    K3p = _round_up(K3, 128)          # lane-dense contraction dim
    N = R * C_out

    # toep[kr][r_in, r_out] = 1 iff r_in - r_out == kr  (banded r-Toeplitz)
    toep = [jnp.eye(Rp, R, k=-kr, dtype=jnp.float32) for kr in range(3)]
    w_kz = []
    for kz in range(3):
        blocks = []
        for kp in range(3):
            m = sum(jnp.kron(toep[kr], w[:, :, kz, kp, kr].T) for kr in range(3))
            blocks.append(m)                               # (Kr, N)
        wk = jnp.concatenate(blocks, axis=0)               # rows: kp*Kr + r_in*C_in + ci
        wk = jnp.pad(wk, ((0, K3p - K3), (0, 0)))
        w_kz.append(wk)
    w_big = jnp.stack(w_kz).astype(jnp.bfloat16)           # (3, K3p, N)
    # TODO(synk): on v7x evaluate fp8 for w_big (2x weight DMA/VMEM reduction).

    bias_row = jnp.tile(params["b"], R)[None, :]            # (1, N), lane = r*C_out+co
    gamma_row = jnp.tile(params["gamma"], R)[None, :]
    beta_row = jnp.tile(params["beta"], R)[None, :]

    # Factored GroupNorm mixer: (N,G) group-sum (with 1/count) and (G,N) broadcast.
    cpg = C_out // groups
    gid = (np.arange(N) % C_out) // cpg
    count = float(Z * P * R * cpg)
    gsum = (gid[:, None] == np.arange(groups)[None, :]).astype(np.float32) / count
    gbcast = (np.arange(groups)[:, None] == gid[None, :]).astype(np.float32)

    return dict(w_big=w_big, bias_row=bias_row, gamma_row=gamma_row,
                beta_row=beta_row, gsum=jnp.asarray(gsum),
                gbcast=jnp.asarray(gbcast),
                C_in=C_in, C_out=C_out, groups=groups, K3=K3, K3p=K3p)


# ------------------------------- forward ------------------------------------
def block_forward_pallas(x, prep, scale_shift=None, cylindrical=False, eps=1e-5):
    """x: (B, C_in, Z, P, R) f32  ->  (B, C_out, Z, P, R) f32."""
    B, C_in, Z, P, R = x.shape
    C_out = prep["C_out"]
    N = R * C_out
    K3, K3p = prep["K3"], prep["K3p"]
    G = prep["groups"]

    # NDHWC + halo pad (phi circular for the cylindrical variant), unfold the 3
    # phi taps into the lane dim, pad lanes to a 128 multiple, cast ONCE to bf16.
    xt = jnp.transpose(x, (0, 2, 3, 4, 1))                            # (B,Z,P,R,C)
    xt = jnp.pad(xt, ((0, 0), (1, 1), (0, 0), (1, 1), (0, 0)))        # z, r zero pad
    phi_mode = "wrap" if cylindrical else "constant"
    xt = jnp.pad(xt, ((0, 0), (0, 0), (1, 1), (0, 0), (0, 0)), mode=phi_mode)
    x3 = jnp.stack([xt[:, :, kp:kp + P] for kp in range(3)], axis=3)  # (B,Z+2,P,3,R+2,C)
    x3 = x3.reshape(B, Z + 2, P, K3)
    if K3p > K3:
        x3 = jnp.pad(x3, ((0, 0), (0, 0), (0, 0), (0, K3p - K3)))
    x3 = x3.astype(jnp.bfloat16)
    # TODO(synk): keep activations channel-last across the whole network and do
    # the halo/tap gather with in-kernel DMA so these wrapper relayout passes
    # disappear at real sizes.

    if scale_shift is None:
        scale = jnp.zeros((B, C_out), jnp.float32)
        shift = jnp.zeros((B, C_out), jnp.float32)
    else:
        scale, shift = scale_shift
        scale = scale.reshape(B, C_out).astype(jnp.float32)
        shift = shift.reshape(B, C_out).astype(jnp.float32)
    scale_row = jnp.tile(scale, (1, R)).reshape(B, 1, N)
    shift_row = jnp.tile(shift, (1, R)).reshape(B, 1, N)

    kernel = _make_block_kernel(Z, P, K3p, N, eps)

    # TODO(synk): for large Z*P*R / channel counts, add reduction+parallel grid
    # axes (Z-/N-tiles with a two-pass GroupNorm) so resident weights and the
    # activation block stay within v7x's 64 MiB VMEM and both TCs get work at B=1.
    out = pl.pallas_call(
        kernel,
        out_shape=jax.ShapeDtypeStruct((B, Z * P, N), jnp.float32),
        grid=(B,),
        in_specs=[
            pl.BlockSpec((1, Z + 2, P, K3p), lambda b: (b, 0, 0, 0)),  # x taps (bf16)
            pl.BlockSpec((3, K3p, N), lambda b: (0, 0, 0)),            # conv W (bf16)
            pl.BlockSpec((1, N), lambda b: (0, 0)),                    # bias row
            pl.BlockSpec((1, N), lambda b: (0, 0)),                    # gamma row
            pl.BlockSpec((1, N), lambda b: (0, 0)),                    # beta row
            pl.BlockSpec((N, G), lambda b: (0, 0)),                    # group-sum
            pl.BlockSpec((G, N), lambda b: (0, 0)),                    # group-bcast
            pl.BlockSpec((1, 1, N), lambda b: (b, 0, 0)),              # FiLM scale
            pl.BlockSpec((1, 1, N), lambda b: (b, 0, 0)),              # FiLM shift
        ],
        out_specs=pl.BlockSpec((1, Z * P, N), lambda b: (b, 0, 0)),
        compiler_params=pltpu.CompilerParams(
            dimension_semantics=("parallel",),
            vmem_limit_bytes=32 * 1024 * 1024),
    )(x3, prep["w_big"], prep["bias_row"], prep["gamma_row"], prep["beta_row"],
      prep["gsum"], prep["gbcast"], scale_row, shift_row)

    y = out.reshape(B, Z, P, R, C_out)
    return jnp.transpose(y, (0, 4, 1, 2, 3))       # back to (B, C_out, Z, P, R)


# --------------------- pure-JAX reference (PyTorch semantics) ---------------
def block_forward_ref(x, params, groups, scale_shift=None, cylindrical=False,
                      eps=1e-5):
    w, b = params["w"], params["b"]
    gamma, beta = params["gamma"], params["beta"]
    if cylindrical:
        x = jnp.pad(x, ((0, 0), (0, 0), (0, 0), (1, 1), (0, 0)), mode="wrap")
        padding = [(1, 1), (0, 0), (1, 1)]
    else:
        padding = [(1, 1), (1, 1), (1, 1)]
    y = jax.lax.conv_general_dilated(
        x, w, window_strides=(1, 1, 1), padding=padding,
        dimension_numbers=("NCDHW", "OIDHW", "NCDHW"),
        precision=jax.lax.Precision.HIGHEST)
    y = y + b[None, :, None, None, None]
    B, C = y.shape[:2]
    yg = y.reshape(B, groups, C // groups, *y.shape[2:])
    mean = yg.mean(axis=(2, 3, 4, 5), keepdims=True)
    var = ((yg - mean) ** 2).mean(axis=(2, 3, 4, 5), keepdims=True)
    yn = ((yg - mean) / jnp.sqrt(var + eps)).reshape(y.shape)
    y = yn * gamma[None, :, None, None, None] + beta[None, :, None, None, None]
    if scale_shift is not None:
        scale, shift = scale_shift
        y = y * (scale.reshape(B, C, 1, 1, 1) + 1.0) + shift.reshape(B, C, 1, 1, 1)
    return y * jax.nn.sigmoid(y)


# ------------------------------------ test ----------------------------------
if __name__ == "__main__":
    B, C_in, C_out, groups = 2, 4, 16, 8
    Z, P, R = 8, 8, 8                      # r * C_out = 128 -> fully lane-dense
    key = jax.random.PRNGKey(0)
    k_x, k_p, k_s1, k_s2 = jax.random.split(key, 4)

    x = jax.random.normal(k_x, (B, C_in, Z, P, R), jnp.float32)
    params = init_block_params(k_p, C_in, C_out)
    prep = prepare_block_params(params, (Z, P, R), groups)

    scale = 0.1 * jax.random.normal(k_s1, (B, C_out), jnp.float32)
    shift = 0.1 * jax.random.normal(k_s2, (B, C_out), jnp.float32)

    # path with FiLM scale/shift (regular zero-padded conv)
    out = jax.block_until_ready(
        block_forward_pallas(x, prep, scale_shift=(scale, shift)))
    ref = block_forward_ref(x, params, groups, scale_shift=(scale, shift))
    assert out.shape == (B, C_out, Z, P, R)
    assert bool(jnp.all(jnp.isfinite(out)))
    # NOTE: conv operands intentionally bf16 vs f32-HIGHEST reference -> 3e-2 tol.
    np.testing.assert_allclose(np.asarray(out), np.asarray(ref),
                               rtol=3e-2, atol=3e-2)

    # default path (scale_shift=None), cylindrical (circular phi) conv
    out2 = jax.block_until_ready(block_forward_pallas(x, prep, cylindrical=True))
    ref2 = block_forward_ref(x, params, groups, cylindrical=True)
    np.testing.assert_allclose(np.asarray(out2), np.asarray(ref2),
                               rtol=3e-2, atol=3e-2)

    print("KERNEL_OK")
</pallas_src>

<mosaic_0001>
module attributes {stable_mosaic.version = 11 : i64} {
  func.func @kernel(%arg0: i32, %arg1: memref<1x10x8x128xbf16, #tpu.memory_space<vmem>>, %arg2: memref<3x128x128xbf16, #tpu.memory_space<vmem>>, %arg3: memref<1x128xf32, #tpu.memory_space<vmem>>, %arg4: memref<1x128xf32, #tpu.memory_space<vmem>>, %arg5: memref<1x128xf32, #tpu.memory_space<vmem>>, %arg6: memref<128x8xf32, #tpu.memory_space<vmem>>, %arg7: memref<8x128xf32, #tpu.memory_space<vmem>>, %arg8: memref<1x1x128xf32, #tpu.memory_space<vmem>>, %arg9: memref<1x1x128xf32, #tpu.memory_space<vmem>>, %arg10: memref<1x64x128xf32, #tpu.memory_space<vmem>>) attributes {dimension_semantics = [#tpu.dimension_semantics<parallel>], iteration_bounds = array<i64: 2>, scalar_prefetch = 0 : i64, scratch_operands = 0 : i64, tpu.core_type = #tpu.core_type<tc>, window_params = [{transform_indices = @transform_0, window_bounds = array<i64: 1, 10, 8, 128>}, {pipeline_mode = #tpu.pipeline_mode<synchronous>, transform_indices = @transform_1, window_bounds = array<i64: 3, 128, 128>}, {pipeline_mode = #tpu.pipeline_mode<synchronous>, transform_indices = @transform_2, window_bounds = array<i64: 1, 128>}, {pipeline_mode = #tpu.pipeline_mode<synchronous>, transform_indices = @transform_3, window_bounds = array<i64: 1, 128>}, {pipeline_mode = #tpu.pipeline_mode<synchronous>, transform_indices = @transform_4, window_bounds = array<i64: 1, 128>}, {pipeline_mode = #tpu.pipeline_mode<synchronous>, transform_indices = @transform_5, window_bounds = array<i64: 128, 8>}, {pipeline_mode = #tpu.pipeline_mode<synchronous>, transform_indices = @transform_6, window_bounds = array<i64: 8, 128>}, {transform_indices = @transform_7, window_bounds = array<i64: 1, 1, 128>}, {transform_indices = @transform_8, window_bounds = array<i64: 1, 1, 128>}, {transform_indices = @transform_9, window_bounds = array<i64: 1, 64, 128>}]} {
    %cst = arith.constant 0.000000e+00 : f32
    %0 = vector.broadcast %cst : f32 to vector<64x128xf32>
    %c0 = arith.constant 0 : index
    %c0_0 = arith.constant 0 : index
    %c0_1 = arith.constant 0 : index
    %c0_2 = arith.constant 0 : index
    %1 = vector.load %arg1[%c0, %c0_0, %c0_1, %c0_2] : memref<1x10x8x128xbf16, #tpu.memory_space<vmem>>, vector<1x8x8x128xbf16>
    %2 = vector.shape_cast %1 : vector<1x8x8x128xbf16> to vector<8x8x128xbf16>
    %3 = vector.shape_cast %2 : vector<8x8x128xbf16> to vector<64x128xbf16>
    %c0_3 = arith.constant 0 : index
    %c0_4 = arith.constant 0 : index
    %c0_5 = arith.constant 0 : index
    %4 = vector.load %arg2[%c0_3, %c0_4, %c0_5] : memref<3x128x128xbf16, #tpu.memory_space<vmem>>, vector<1x128x128xbf16>
    %5 = vector.shape_cast %4 : vector<1x128x128xbf16> to vector<128x128xbf16>
    %cst_6 = arith.constant dense<0.000000e+00> : vector<64x128xf32>
    %6 = tpu.matmul %3, %5, %cst_6 {dimension_numbers = #tpu.dot_dimension_numbers<[1], [0], [0], [1], [0, 0, 1, 1], [], []>} : vector<64x128xbf16>, vector<128x128xbf16>, vector<64x128xf32> -> vector<64x128xf32>
    %7 = arith.addf %0, %6 : vector<64x128xf32>
    %c0_7 = arith.constant 0 : index
    %c1 = arith.constant 1 : index
    %c0_8 = arith.constant 0 : index
    %c0_9 = arith.constant 0 : index
    %8 = vector.load %arg1[%c0_7, %c1, %c0_8, %c0_9] : memref<1x10x8x128xbf16, #tpu.memory_space<vmem>>, vector<1x8x8x128xbf16>
    %9 = vector.shape_cast %8 : vector<1x8x8x128xbf16> to vector<8x8x128xbf16>
    %10 = vector.shape_cast %9 : vector<8x8x128xbf16> to vector<64x128xbf16>
    %c1_10 = arith.constant 1 : index
    %c0_11 = arith.constant 0 : index
    %c0_12 = arith.constant 0 : index
    %11 = vector.load %arg2[%c1_10, %c0_11, %c0_12] : memref<3x128x128xbf16, #tpu.memory_space<vmem>>, vector<1x128x128xbf16>
    %12 = vector.shape_cast %11 : vector<1x128x128xbf16> to vector<128x128xbf16>
    %cst_13 = arith.constant dense<0.000000e+00> : vector<64x128xf32>
    %13 = tpu.matmul %10, %12, %cst_13 {dimension_numbers = #tpu.dot_dimension_numbers<[1], [0], [0], [1], [0, 0, 1, 1], [], []>} : vector<64x128xbf16>, vector<128x128xbf16>, vector<64x128xf32> -> vector<64x128xf32>
    %14 = arith.addf %7, %13 : vector<64x128xf32>
    %c0_14 = arith.constant 0 : index
    %c2 = arith.constant 2 : index
    %c0_15 = arith.constant 0 : index
    %c0_16 = arith.constant 0 : index
    %15 = vector.load %arg1[%c0_14, %c2, %c0_15, %c0_16] : memref<1x10x8x128xbf16, #tpu.memory_space<vmem>>, vector<1x8x8x128xbf16>
    %16 = vector.shape_cast %15 : vector<1x8x8x128xbf16> to vector<8x8x128xbf16>
    %17 = vector.shape_cast %16 : vector<8x8x128xbf16> to vector<64x128xbf16>
    %c2_17 = arith.constant 2 : index
    %c0_18 = arith.constant 0 : index
    %c0_19 = arith.constant 0 : index
    %18 = vector.load %arg2[%c2_17, %c0_18, %c0_19] : memref<3x128x128xbf16, #tpu.memory_space<vmem>>, vector<1x128x128xbf16>
    %19 = vector.shape_cast %18 : vector<1x128x128xbf16> to vector<128x128xbf16>
    %cst_20 = arith.constant dense<0.000000e+00> : vector<64x128xf32>
    %20 = tpu.matmul %17, %19, %cst_20 {dimension_numbers = #tpu.dot_dimension_numbers<[1], [0], [0], [1], [0, 0, 1, 1], [], []>} : vector<64x128xbf16>, vector<128x128xbf16>, vector<64x128xf32> -> vector<64x128xf32>
    %21 = arith.addf %14, %20 : vector<64x128xf32>
    %c0_21 = arith.constant 0 : index
    %c0_22 = arith.constant 0 : index
    %22 = vector.load %arg3[%c0_21, %c0_22] : memref<1x128xf32, #tpu.memory_space<vmem>>, vector<1x128xf32>
    %cst_23 = arith.constant dense<0.000000e+00> : vector<128xf32>
    %23 = vector.multi_reduction <add>, %21, %cst_23 [0] : vector<64x128xf32> to vector<128xf32>
    %24 = vector.shape_cast %23 : vector<128xf32> to vector<1x128xf32>
    %25 = arith.mulf %21, %21 : vector<64x128xf32>
    %cst_24 = arith.constant dense<0.000000e+00> : vector<128xf32>
    %26 = vector.multi_reduction <add>, %25, %cst_24 [0] : vector<64x128xf32> to vector<128xf32>
    %27 = vector.shape_cast %26 : vector<128xf32> to vector<1x128xf32>
    %cst_25 = arith.constant 6.400000e+01 : f32
    %28 = vector.broadcast %cst_25 : f32 to vector<1x128xf32>
    %29 = arith.mulf %28, %22 : vector<1x128xf32>
    %30 = arith.addf %24, %29 : vector<1x128xf32>
    %cst_26 = arith.constant 2.000000e+00 : f32
    %31 = vector.broadcast %cst_26 : f32 to vector<1x128xf32>
    %32 = arith.mulf %31, %22 : vector<1x128xf32>
    %33 = arith.mulf %32, %24 : vector<1x128xf32>
    %34 = arith.addf %27, %33 : vector<1x128xf32>
    %cst_27 = arith.constant 6.400000e+01 : f32
    %35 = vector.broadcast %cst_27 : f32 to vector<1x128xf32>
    %36 = arith.mulf %35, %22 : vector<1x128xf32>
    %37 = arith.mulf %36, %22 : vector<1x128xf32>
    %38 = arith.addf %34, %37 : vector<1x128xf32>
    %c0_28 = arith.constant 0 : index
    %c0_29 = arith.constant 0 : index
    %39 = vector.load %arg6[%c0_28, %c0_29] : memref<128x8xf32, #tpu.memory_space<vmem>>, vector<128x8xf32>
    %cst_30 = arith.constant dense<0.000000e+00> : vector<1x8xf32>
    %40 = tpu.matmul %30, %39, %cst_30 {dimension_numbers = #tpu.dot_dimension_numbers<[1], [0], [0], [1], [0, 0, 1, 1], [], []>} : vector<1x128xf32>, vector<128x8xf32>, vector<1x8xf32> -> vector<1x8xf32>
    %c0_31 = arith.constant 0 : index
    %c0_32 = arith.constant 0 : index
    %41 = vector.load %arg7[%c0_31, %c0_32] : memref<8x128xf32, #tpu.memory_space<vmem>>, vector<8x128xf32>
    %cst_33 = arith.constant dense<0.000000e+00> : vector<1x128xf32>
    %42 = tpu.matmul %40, %41, %cst_33 {dimension_numbers = #tpu.dot_dimension_numbers<[1], [0], [0], [1], [0, 0, 1, 1], [], []>} : vector<1x8xf32>, vector<8x128xf32>, vector<1x128xf32> -> vector<1x128xf32>
    %c0_34 = arith.constant 0 : index
    %c0_35 = arith.constant 0 : index
    %43 = vector.load %arg6[%c0_34, %c0_35] : memref<128x8xf32, #tpu.memory_space<vmem>>, vector<128x8xf32>
    %cst_36 = arith.constant dense<0.000000e+00> : vector<1x8xf32>
    %44 = tpu.matmul %38, %43, %cst_36 {dimension_numbers = #tpu.dot_dimension_numbers<[1], [0], [0], [1], [0, 0, 1, 1], [], []>} : vector<1x128xf32>, vector<128x8xf32>, vector<1x8xf32> -> vector<1x8xf32>
    %c0_37 = arith.constant 0 : index
    %c0_38 = arith.constant 0 : index
    %45 = vector.load %arg7[%c0_37, %c0_38] : memref<8x128xf32, #tpu.memory_space<vmem>>, vector<8x128xf32>
    %cst_39 = arith.constant dense<0.000000e+00> : vector<1x128xf32>
    %46 = tpu.matmul %44, %45, %cst_39 {dimension_numbers = #tpu.dot_dimension_numbers<[1], [0], [0], [1], [0, 0, 1, 1], [], []>} : vector<1x8xf32>, vector<8x128xf32>, vector<1x128xf32> -> vector<1x128xf32>
    %47 = arith.mulf %42, %42 : vector<1x128xf32>
    %48 = arith.subf %46, %47 : vector<1x128xf32>
    %cst_40 = arith.constant 0.000000e+00 : f32
    %49 = vector.broadcast %cst_40 : f32 to vector<1x128xf32>
    %50 = arith.maximumf %48, %49 : vector<1x128xf32>
    %cst_41 = arith.constant 9.99999974E-6 : f32
    %51 = vector.broadcast %cst_41 : f32 to vector<1x128xf32>
    %52 = arith.addf %50, %51 : vector<1x128xf32>
    %53 = math.rsqrt %52 : vector<1x128xf32>
    %c0_42 = arith.constant 0 : index
    %c0_43 = arith.constant 0 : index
    %c0_44 = arith.constant 0 : index
    %54 = vector.load %arg8[%c0_42, %c0_43, %c0_44] : memref<1x1x128xf32, #tpu.memory_space<vmem>>, vector<1x1x128xf32>
    %55 = vector.shape_cast %54 : vector<1x1x128xf32> to vector<1x128xf32>
    %cst_45 = arith.constant 1.000000e+00 : f32
    %56 = vector.broadcast %cst_45 : f32 to vector<1x128xf32>
    %57 = arith.addf %55, %56 : vector<1x128xf32>
    %c0_46 = arith.constant 0 : index
    %c0_47 = arith.constant 0 : index
    %58 = vector.load %arg4[%c0_46, %c0_47] : memref<1x128xf32, #tpu.memory_space<vmem>>, vector<1x128xf32>
    %59 = arith.mulf %53, %58 : vector<1x128xf32>
    %60 = arith.mulf %59, %57 : vector<1x128xf32>
    %61 = arith.subf %22, %42 : vector<1x128xf32>
    %62 = arith.mulf %61, %60 : vector<1x128xf32>
    %c0_48 = arith.constant 0 : index
    %c0_49 = arith.constant 0 : index
    %63 = vector.load %arg5[%c0_48, %c0_49] : memref<1x128xf32, #tpu.memory_space<vmem>>, vector<1x128xf32>
    %64 = arith.mulf %63, %57 : vector<1x128xf32>
    %65 = arith.addf %62, %64 : vector<1x128xf32>
    %c0_50 = arith.constant 0 : index
    %c0_51 = arith.constant 0 : index
    %c0_52 = arith.constant 0 : index
    %66 = vector.load %arg9[%c0_50, %c0_51, %c0_52] : memref<1x1x128xf32, #tpu.memory_space<vmem>>, vector<1x1x128xf32>
    %67 = vector.shape_cast %66 : vector<1x1x128xf32> to vector<1x128xf32>
    %68 = arith.addf %65, %67 : vector<1x128xf32>
    %69 = vector.broadcast %60 : vector<1x128xf32> to vector<64x128xf32>
    %70 = arith.mulf %21, %69 : vector<64x128xf32>
    %71 = vector.broadcast %68 : vector<1x128xf32> to vector<64x128xf32>
    %72 = arith.addf %70, %71 : vector<64x128xf32>
    %cst_53 = arith.constant 0.000000e+00 : f32
    %73 = vector.broadcast %cst_53 : f32 to vector<64x128xf32>
    %74 = arith.subf %73, %72 : vector<64x128xf32>
    %75 = math.exp %74 : vector<64x128xf32>
    %cst_54 = arith.constant 1.000000e+00 : f32
    %76 = vector.broadcast %cst_54 : f32 to vector<64x128xf32>
    %77 = arith.addf %76, %75 : vector<64x128xf32>
    %78 = tpu.reciprocal %77 {approx = true} : vector<64x128xf32> -> vector<64x128xf32>
    %79 = arith.mulf %72, %78 : vector<64x128xf32>
    %c0_55 = arith.constant 0 : index
    %c0_56 = arith.constant 0 : index
    %c0_57 = arith.constant 0 : index
    %80 = vector.load %arg10[%c0_55, %c0_56, %c0_57] : memref<1x64x128xf32, #tpu.memory_space<vmem>>, vector<1x64x128xf32>
    %81 = vector.shape_cast %80 : vector<1x64x128xf32> to vector<64x128xf32>
    %82 = vector.shape_cast %79 : vector<64x128xf32> to vector<1x64x128xf32>
    tpu.vector_store %arg10[%c0_55, %c0_56, %c0_57], %82 {strides = array<i32>} : memref<1x64x128xf32, #tpu.memory_space<vmem>>, vector<1x64x128xf32>,
    return
  }
  func.func @transform_0(%arg0: i32) -> (i32, i32, i32, i32) {
    %c0_i32 = arith.constant 0 : i32
    %c0_i32_0 = arith.constant 0 : i32
    %c0_i32_1 = arith.constant 0 : i32
    %c0_i32_2 = arith.constant 0 : i32
    return %arg0, %c0_i32, %c0_i32_0, %c0_i32_1 : i32, i32, i32, i32
  }
  func.func @transform_1(%arg0: i32) -> (i32, i32, i32) {
    %c0_i32 = arith.constant 0 : i32
    %c0_i32_0 = arith.constant 0 : i32
    %c0_i32_1 = arith.constant 0 : i32
    %c0_i32_2 = arith.constant 0 : i32
    return %c0_i32, %c0_i32_0, %c0_i32_1 : i32, i32, i32
  }
  func.func @transform_2(%arg0: i32) -> (i32, i32) {
    %c0_i32 = arith.constant 0 : i32
    %c0_i32_0 = arith.constant 0 : i32
    %c0_i32_1 = arith.constant 0 : i32
    return %c0_i32, %c0_i32_0 : i32, i32
  }
  func.func @transform_3(%arg0: i32) -> (i32, i32) {
    %c0_i32 = arith.constant 0 : i32
    %c0_i32_0 = arith.constant 0 : i32
    %c0_i32_1 = arith.constant 0 : i32
    return %c0_i32, %c0_i32_0 : i32, i32
  }
  func.func @transform_4(%arg0: i32) -> (i32, i32) {
    %c0_i32 = arith.constant 0 : i32
    %c0_i32_0 = arith.constant 0 : i32
    %c0_i32_1 = arith.constant 0 : i32
    return %c0_i32, %c0_i32_0 : i32, i32
  }
  func.func @transform_5(%arg0: i32) -> (i32, i32) {
    %c0_i32 = arith.constant 0 : i32
    %c0_i32_0 = arith.constant 0 : i32
    %c0_i32_1 = arith.constant 0 : i32
    return %c0_i32, %c0_i32_0 : i32, i32
  }
  func.func @transform_6(%arg0: i32) -> (i32, i32) {
    %c0_i32 = arith.constant 0 : i32
    %c0_i32_0 = arith.constant 0 : i32
    %c0_i32_1 = arith.constant 0 : i32
    return %c0_i32, %c0_i32_0 : i32, i32
  }
  func.func @transform_7(%arg0: i32) -> (i32, i32, i32) {
    %c0_i32 = arith.constant 0 : i32
    %c0_i32_0 = arith.constant 0 : i32
    %c0_i32_1 = arith.constant 0 : i32
    return %arg0, %c0_i32, %c0_i32_0 : i32, i32, i32
  }
  func.func @transform_8(%arg0: i32) -> (i32, i32, i32) {
    %c0_i32 = arith.constant 0 : i32
    %c0_i32_0 = arith.constant 0 : i32
    %c0_i32_1 = arith.constant 0 : i32
    return %arg0, %c0_i32, %c0_i32_0 : i32, i32, i32
  }
  func.func @transform_9(%arg0: i32) -> (i32, i32, i32) {
    %c0_i32 = arith.constant 0 : i32
    %c0_i32_0 = arith.constant 0 : i32
    %c0_i32_1 = arith.constant 0 : i32
    return %arg0, %c0_i32, %c0_i32_0 : i32, i32, i32
  }
}

</mosaic_0001>

<llo_original>
// kernel: tpu_custom_call.1
$region0: #{tpu_custom_call.1}
  #allocation0 [shape = 'u32[]', space=smem, size = 0x4, offset = 0x4, fixed_abs, tag = 'smem constant byte address 0x4 - core index']
  #allocation1 [shape = 'u32[144,128]{1,0:T(1,128)}', space=vmem, size = 0x12000, scoped, tag = 'internal scratch']
  %s0 = inlined_call_operand.vmem [shape: bf16[2,10,8,128], index: 0, kind: input, shape index: {}]
  %s1 = inlined_call_operand.hbm [shape: bf16[3,128,128], index: 1, kind: input, shape index: {}]
  %s2 = inlined_call_operand.vmem [shape: f32[1,128], index: 2, kind: input, shape index: {}]
  %s3 = inlined_call_operand.vmem [shape: f32[1,128], index: 3, kind: input, shape index: {}]
  %s4 = inlined_call_operand.vmem [shape: f32[1,128], index: 4, kind: input, shape index: {}]
  %s5 = inlined_call_operand.vmem [shape: f32[128,8], index: 5, kind: input, shape index: {}]
  %s6 = inlined_call_operand.vmem [shape: f32[8,128], index: 6, kind: input, shape index: {}]
  %s7 = inlined_call_operand.vmem [shape: f32[2,1,128], index: 7, kind: input, shape index: {}]
  %s8 = inlined_call_operand.vmem [shape: f32[2,1,128], index: 8, kind: input, shape index: {}]
  %s9 = inlined_call_operand.hbm [shape: f32[2,64,128], index: 9, kind: output, shape index: {}]
  %s10 = sld [smem:[#allocation0]]
  $region73: #{tpu_custom_call.1} parent=0
    _
  %s12 = ssub.s32 1, %s10
  %s13 = scalar_select 0, %s12, %s10
  $region1: #{tpu_custom_call.1} parent=0
    #allocation2 [shape = 'u8[98304]{0}', space=vmem, size = 0x18000, scoped, tag = 'input window, operand 1, single buffered']
    #allocation3 [shape = 's32[2]{0}', space=sflag, size = 0x8, scoped, tag = 'scoped memory for tpu_custom_call.1']
    #allocation4 [shape = 's32[2]{0}', space=sflag, size = 0x8, scoped, tag = 'scoped memory for tpu_custom_call.1']
    #allocation5 [shape = 'u8[65536]{0}', space=vmem, size = 0x10000, scoped, tag = 'output window, operand 0']
    %14 = vsyncpa [#allocation3], 0
    %15 = vsyncpa [#allocation4], 0
    %s16 = scalar_lea.sflag [#allocation4], 1
    %17 = vsyncpa %s16, 0
    loop: start=0, step=1, limit=4
    $region2: #{tpu_custom_call.1} parent=1 // loop_pre_header
      _
    $region3: #{tpu_custom_call.1} parent=1 // loop_header
      %s19 = sphi 0, %s23
      %p20 = scmp.ge.s32.totalorder %s19, 4
      %s29 = sphi 0, %s31
      %s32 = sphi 0, %s29
      %s33 = sphi 0, %s32
      %s49 = sphi 0, %s33
      %s53 = sphi 0, %s53
      %s55 = sphi 0, %s53
      %s56 = sphi 0, %s55
      %s70 = sphi 0, %s56
      %s74 = sphi 0, %s74
      %s76 = sphi 0, %s74
      %s77 = sphi 0, %s76
      %s91 = sphi 0, %s77
      %s95 = sphi 0, %s95
      %s97 = sphi 0, %s95
      %s98 = sphi 0, %s97
      %s112 = sphi 0, %s98
      %s116 = sphi 0, %s116
      %s118 = sphi 0, %s116
      %s119 = sphi 0, %s118
      %s133 = sphi 0, %s119
      %s137 = sphi 0, %s137
      %s139 = sphi 0, %s137
      %s140 = sphi 0, %s139
      %s154 = sphi 0, %s140
      %s158 = sphi 0, %s158
      %s160 = sphi 0, %s158
      %s161 = sphi 0, %s160
      %s175 = sphi 0, %s161
      %s181 = sphi 0, %s183
      %s184 = sphi 0, %s181
      %s185 = sphi 0, %s184
      %s201 = sphi 0, %s185
      %s207 = sphi 0, %s209
      %s210 = sphi 0, %s207
      %s211 = sphi 0, %s210
      %s227 = sphi 0, %s211
      %s233 = sphi 0, %s235
      %s236 = sphi 0, %s233
      %s237 = sphi 0, %s236
      %s253 = sphi 0, %s237
    $region4: #{tpu_custom_call.1} parent=1 // loop_header_branch
      %22 = sbr.rel (%p20) target = $region8
    $region5: #{tpu_custom_call.1} parent=1 // loop_body
      %s24 = ssub.s32 %s19, 1
      %s25 = ssub.s32 %s19, 2
      %s26 = sadd.s32 %s19, 1
      %s27 = ssub.s32 %s19, %s26
      %p28 = scmp.eq.s32.totalorder %s27, 0
      %s30 = sadd.s32 %s29, 1
      %s31 = scalar_select %p28, %s29, %s30
      %p34 = pneg %p28
      %p35 = scmp.eq.s32.totalorder %s19, 1
      %p36 = por %p34, %p35
      %p37 = scmp.ne.s32.totalorder %s29, %s32
      %p38 = scmp.eq.s32.totalorder %s19, 0
      %p39 = por %p37, %p38
      %p40 = scmp.ne.s32.totalorder %s29, %s32
      %p41 = scmp.eq.s32.totalorder %s24, 1
      %p42 = por %p40, %p41
      %p43 = scmp.ne.s32.totalorder %s32, %s33
      %p44 = scmp.eq.s32.totalorder %s24, 0
      %p45 = por %p43, %p44
      %p46 = scmp.ne.s32.totalorder %s32, %s33
      %p47 = scmp.eq.s32.totalorder %s25, 1
      %p48 = por %p46, %p47
      %p50 = scmp.ne.s32.totalorder %s33, %s49
      %p51 = scmp.eq.s32.totalorder %s25, 0
      %p52 = por %p50, %p51
      %s54 = sadd.s32 %s53, 1
      %p57 = scmp.eq.s32.totalorder %s19, 1
      %p58 = scmp.ne.s32.totalorder %s53, %s55
      %p59 = scmp.eq.s32.totalorder %s19, 0
      %p60 = por %p58, %p59
      %p61 = scmp.ne.s32.totalorder %s53, %s55
      %p62 = scmp.eq.s32.totalorder %s24, 1
      %p63 = por %p61, %p62
      %p64 = scmp.ne.s32.totalorder %s55, %s56
      %p65 = scmp.eq.s32.totalorder %s24, 0
      %p66 = por %p64, %p65
      %p67 = scmp.ne.s32.totalorder %s55, %s56
      %p68 = scmp.eq.s32.totalorder %s25, 1
      %p69 = por %p67, %p68
      %p71 = scmp.ne.s32.totalorder %s56, %s70
      %p72 = scmp.eq.s32.totalorder %s25, 0
      %p73 = por %p71, %p72
      %s75 = sadd.s32 %s74, 1
      %p78 = scmp.eq.s32.totalorder %s19, 1
      %p79 = scmp.ne.s32.totalorder %s74, %s76
      %p80 = scmp.eq.s32.totalorder %s19, 0
      %p81 = por %p79, %p80
      %p82 = scmp.ne.s32.totalorder %s74, %s76
      %p83 = scmp.eq.s32.totalorder %s24, 1
      %p84 = por %p82, %p83
      %p85 = scmp.ne.s32.totalorder %s76, %s77
      %p86 = scmp.eq.s32.totalorder %s24, 0
      %p87 = por %p85, %p86
      %p88 = scmp.ne.s32.totalorder %s76, %s77
      %p89 = scmp.eq.s32.totalorder %s25, 1
      %p90 = por %p88, %p89
      %p92 = scmp.ne.s32.totalorder %s77, %s91
      %p93 = scmp.eq.s32.totalorder %s25, 0
      %p94 = por %p92, %p93
      %s96 = sadd.s32 %s95, 1
      %p99 = scmp.eq.s32.totalorder %s19, 1
      %p100 = scmp.ne.s32.totalorder %s95, %s97
      %p101 = scmp.eq.s32.totalorder %s19, 0
      %p102 = por %p100, %p101
      %p103 = scmp.ne.s32.totalorder %s95, %s97
      %p104 = scmp.eq.s32.totalorder %s24, 1
      %p105 = por %p103, %p104
      %p106 = scmp.ne.s32.totalorder %s97, %s98
      %p107 = scmp.eq.s32.totalorder %s24, 0
      %p108 = por %p106, %p107
      %p109 = scmp.ne.s32.totalorder %s97, %s98
      %p110 = scmp.eq.s32.totalorder %s25, 1
      %p111 = por %p109, %p110
      %p113 = scmp.ne.s32.totalorder %s98, %s112
      %p114 = scmp.eq.s32.totalorder %s25, 0
      %p115 = por %p113, %p114
      %s117 = sadd.s32 %s116, 1
      %p120 = scmp.eq.s32.totalorder %s19, 1
      %p121 = scmp.ne.s32.totalorder %s116, %s118
      %p122 = scmp.eq.s32.totalorder %s19, 0
      %p123 = por %p121, %p122
      %p124 = scmp.ne.s32.totalorder %s116, %s118
      %p125 = scmp.eq.s32.totalorder %s24, 1
      %p126 = por %p124, %p125
      %p127 = scmp.ne.s32.totalorder %s118, %s119
      %p128 = scmp.eq.s32.totalorder %s24, 0
      %p129 = por %p127, %p128
      %p130 = scmp.ne.s32.totalorder %s118, %s119
      %p131 = scmp.eq.s32.totalorder %s25, 1
      %p132 = por %p130, %p131
      %p134 = scmp.ne.s32.totalorder %s119, %s133
      %p135 = scmp.eq.s32.totalorder %s25, 0
      %p136 = por %p134, %p135
      %s138 = sadd.s32 %s137, 1
      %p141 = scmp.eq.s32.totalorder %s19, 1
      %p142 = scmp.ne.s32.totalorder %s137, %s139
      %p143 = scmp.eq.s32.totalorder %s19, 0
      %p144 = por %p142, %p143
      %p145 = scmp.ne.s32.totalorder %s137, %s139
      %p146 = scmp.eq.s32.totalorder %s24, 1
      %p147 = por %p145, %p146
      %p148 = scmp.ne.s32.totalorder %s139, %s140
      %p149 = scmp.eq.s32.totalorder %s24, 0
      %p150 = por %p148, %p149
      %p151 = scmp.ne.s32.totalorder %s139, %s140
      %p152 = scmp.eq.s32.totalorder %s25, 1
      %p153 = por %p151, %p152
      %p155 = scmp.ne.s32.totalorder %s140, %s154
      %p156 = scmp.eq.s32.totalorder %s25, 0
      %p157 = por %p155, %p156
      %s159 = sadd.s32 %s158, 1
      %p162 = scmp.eq.s32.totalorder %s19, 1
      %p163 = scmp.ne.s32.totalorder %s158, %s160
      %p164 = scmp.eq.s32.totalorder %s19, 0
      %p165 = por %p163, %p164
      %p166 = scmp.ne.s32.totalorder %s158, %s160
      %p167 = scmp.eq.s32.totalorder %s24, 1
      %p168 = por %p166, %p167
      %p169 = scmp.ne.s32.totalorder %s160, %s161
      %p170 = scmp.eq.s32.totalorder %s24, 0
      %p171 = por %p169, %p170
      %p172 = scmp.ne.s32.totalorder %s160, %s161
      %p173 = scmp.eq.s32.totalorder %s25, 1
      %p174 = por %p172, %p173
      %p176 = scmp.ne.s32.totalorder %s161, %s175
      %p177 = scmp.eq.s32.totalorder %s25, 0
      %p178 = por %p176, %p177
      %s179 = ssub.s32 %s19, %s26
      %p180 = scmp.eq.s32.totalorder %s179, 0
      %s182 = sadd.s32 %s181, 1
      %s183 = scalar_select %p180, %s181, %s182
      %p186 = pneg %p180
      %p187 = scmp.eq.s32.totalorder %s19, 1
      %p188 = por %p186, %p187
      %p189 = scmp.ne.s32.totalorder %s181, %s184
      %p190 = scmp.eq.s32.totalorder %s19, 0
      %p191 = por %p189, %p190
      %p192 = scmp.ne.s32.totalorder %s181, %s184
      %p193 = scmp.eq.s32.totalorder %s24, 1
      %p194 = por %p192, %p193
      %p195 = scmp.ne.s32.totalorder %s184, %s185
      %p196 = scmp.eq.s32.totalorder %s24, 0
      %p197 = por %p195, %p196
      %p198 = scmp.ne.s32.totalorder %s184, %s185
      %p199 = scmp.eq.s32.totalorder %s25, 1
      %p200 = por %p198, %p199
      %p202 = scmp.ne.s32.totalorder %s185, %s201
      %p203 = scmp.eq.s32.totalorder %s25, 0
      %p204 = por %p202, %p203
      %s205 = ssub.s32 %s19, %s26
      %p206 = scmp.eq.s32.totalorder %s205, 0
      %s208 = sadd.s32 %s207, 1
      %s209 = scalar_select %p206, %s207, %s208
      %p212 = pneg %p206
      %p213 = scmp.eq.s32.totalorder %s19, 1
      %p214 = por %p212, %p213
      %p215 = scmp.ne.s32.totalorder %s207, %s210
      %p216 = scmp.eq.s32.totalorder %s19, 0
      %p217 = por %p215, %p216
      %p218 = scmp.ne.s32.totalorder %s207, %s210
      %p219 = scmp.eq.s32.totalorder %s24, 1
      %p220 = por %p218, %p219
      %p221 = scmp.ne.s32.totalorder %s210, %s211
      %p222 = scmp.eq.s32.totalorder %s24, 0
      %p223 = por %p221, %p222
      %p224 = scmp.ne.s32.totalorder %s210, %s211
      %p225 = scmp.eq.s32.totalorder %s25, 1
      %p226 = por %p224, %p225
      %p228 = scmp.ne.s32.totalorder %s211, %s227
      %p229 = scmp.eq.s32.totalorder %s25, 0
      %p230 = por %p228, %p229
      %s231 = ssub.s32 %s19, %s26
      %p232 = scmp.eq.s32.totalorder %s231, 0
      %s234 = sadd.s32 %s233, 1
      %s235 = scalar_select %p232, %s233, %s234
      %p238 = pneg %p232
      %p239 = scmp.eq.s32.totalorder %s19, 1
      %p240 = por %p238, %p239
      %p241 = scmp.ne.s32.totalorder %s233, %s236
      %p242 = scmp.eq.s32.totalorder %s19, 0
      %p243 = por %p241, %p242
      %p244 = scmp.ne.s32.totalorder %s233, %s236
      %p245 = scmp.eq.s32.totalorder %s24, 1
      %p246 = por %p244, %p245
      %p247 = scmp.ne.s32.totalorder %s236, %s237
      %p248 = scmp.eq.s32.totalorder %s24, 0
      %p249 = por %p247, %p248
      %p250 = scmp.ne.s32.totalorder %s236, %s237
      %p251 = scmp.eq.s32.totalorder %s25, 1
      %p252 = por %p250, %p251
      %p254 = scmp.ne.s32.totalorder %s237, %s253
      %p255 = scmp.eq.s32.totalorder %s25, 0
      %p256 = por %p254, %p255
      %p257 = scmp.le.s32.totalorder 1, %s19
      %p258 = scmp.lt.s32.totalorder %s19, 3
      %p259 = pnand %p257, %p258
      %p260 = pneg %p259
      // Predicated region
      $region9: #{tpu_custom_call.1} parent=5 // pred_check
        _
      $region10: #{tpu_custom_call.1} parent=5 // pred_check_branch
        %262 = sbr.rel (%p259) target = $region12
      $region11: #{tpu_custom_call.1} parent=5 // pred_region
        %s263 = ssub.s32 %s19, 1
        // Predicated region
        $region13: #{tpu_custom_call.1} parent=11 // pred_check
          %p264 = pneg %p66
        $region14: #{tpu_custom_call.1} parent=11 // pred_check_branch
          %266 = sbr.rel (%p264) target = $region16
        $region15: #{tpu_custom_call.1} parent=11 // pred_region
          %s268 = ssub.s32 3072, 3072
          %269 = vsyncadd [#allocation3], %s268
          %s270 = sshll.u32 [#allocation2], 4
          %s271 = int_to_ptr.vmem [resolvable:$true] %s270
          %276 = dma.hbm_to_vmem [thread:$0]  %s1, 3072, %s271, [#allocation3], 64, 64, 4
        $region16: #{tpu_custom_call.1} parent=11 // pred_fallthru
          _
        // Predicated region
        $region17: #{tpu_custom_call.1} parent=11 // pred_check
          %p277 = pneg %p87
        $region18: #{tpu_custom_call.1} parent=11 // pred_check_branch
          %279 = sbr.rel (%p277) target = $region20
        $region19: #{tpu_custom_call.1} parent=11 // pred_region
          _
        $region20: #{tpu_custom_call.1} parent=11 // pred_fallthru
          _
        // Predicated region
        $region21: #{tpu_custom_call.1} parent=11 // pred_check
          %p280 = pneg %p108
        $region22: #{tpu_custom_call.1} parent=11 // pred_check_branch
          %282 = sbr.rel (%p280) target = $region24
        $region23: #{tpu_custom_call.1} parent=11 // pred_region
          _
        $region24: #{tpu_custom_call.1} parent=11 // pred_fallthru
          _
        // Predicated region
        $region25: #{tpu_custom_call.1} parent=11 // pred_check
          %p283 = pneg %p129
        $region26: #{tpu_custom_call.1} parent=11 // pred_check_branch
          %285 = sbr.rel (%p283) target = $region28
        $region27: #{tpu_custom_call.1} parent=11 // pred_region
          _
        $region28: #{tpu_custom_call.1} parent=11 // pred_fallthru
          _
        // Predicated region
        $region29: #{tpu_custom_call.1} parent=11 // pred_check
          %p286 = pneg %p150
        $region30: #{tpu_custom_call.1} parent=11 // pred_check_branch
          %288 = sbr.rel (%p286) target = $region32
        $region31: #{tpu_custom_call.1} parent=11 // pred_region
          _
        $region32: #{tpu_custom_call.1} parent=11 // pred_fallthru
          _
        // Predicated region
        $region33: #{tpu_custom_call.1} parent=11 // pred_check
          %p289 = pneg %p171
        $region34: #{tpu_custom_call.1} parent=11 // pred_check_branch
          %291 = sbr.rel (%p289) target = $region36
        $region35: #{tpu_custom_call.1} parent=11 // pred_region
          _
        $region36: #{tpu_custom_call.1} parent=11 // pred_fallthru
          _
      $region12: #{tpu_custom_call.1} parent=5 // pred_fallthru
        _
      %p292 = scmp.lt.s32.totalorder %s19, 2
      // Predicated region
      $region37: #{tpu_custom_call.1} parent=5 // pred_check
        %p293 = pneg %p292
      $region38: #{tpu_custom_call.1} parent=5 // pred_check_branch
        %295 = sbr.rel (%p293) target = $region40
      $region39: #{tpu_custom_call.1} parent=5 // pred_region
        // Predicated region
        $region41: #{tpu_custom_call.1} parent=39 // pred_check
          %p296 = pneg %p39
        $region42: #{tpu_custom_call.1} parent=39 // pred_check_branch
          %298 = sbr.rel (%p296) target = $region44
        $region43: #{tpu_custom_call.1} parent=39 // pred_region
          %p299 = scmp.lt.s32.totalorder %s19, 1
          %s300 = scalar_select %p299, %s19, 1
          %s301 = smul.addr %s300, 10
          %s302 = smul.addr %s301, 4
          %s303 = scalar_lea.vmem %s0, %s302
        $region44: #{tpu_custom_call.1} parent=39 // pred_fallthru
          _
        // Predicated region
        $region45: #{tpu_custom_call.1} parent=39 // pred_check
          %p304 = pneg %p191
        $region46: #{tpu_custom_call.1} parent=39 // pred_check_branch
          %306 = sbr.rel (%p304) target = $region48
        $region47: #{tpu_custom_call.1} parent=39 // pred_region
          %p307 = scmp.lt.s32.totalorder %s19, 1
          %s308 = scalar_select %p307, %s19, 1
          %s309 = scalar_lea.vmem %s7, %s308
        $region48: #{tpu_custom_call.1} parent=39 // pred_fallthru
          _
        // Predicated region
        $region49: #{tpu_custom_call.1} parent=39 // pred_check
          %p310 = pneg %p217
        $region50: #{tpu_custom_call.1} parent=39 // pred_check_branch
          %312 = sbr.rel (%p310) target = $region52
        $region51: #{tpu_custom_call.1} parent=39 // pred_region
          %p313 = scmp.lt.s32.totalorder %s19, 1
          %s314 = scalar_select %p313, %s19, 1
          %s315 = scalar_lea.vmem %s8, %s314
        $region52: #{tpu_custom_call.1} parent=39 // pred_fallthru
          _
      $region40: #{tpu_custom_call.1} parent=5 // pred_fallthru
        _
      %p316 = scmp.le.s32.totalorder 1, %s19
      %p317 = scmp.lt.s32.totalorder %s19, 3
      %p318 = pnand %p316, %p317
      %p319 = pneg %p318
      // Predicated region
      $region53: #{tpu_custom_call.1} parent=5 // pred_check
        _
      $region54: #{tpu_custom_call.1} parent=5 // pred_check_branch
        %321 = sbr.rel (%p318) target = $region56
      $region55: #{tpu_custom_call.1} parent=5 // pred_region
        %s322 = ssub.s32 %s19, 1
        // Predicated region
        $region57: #{tpu_custom_call.1} parent=55 // pred_check
          %p323 = pneg %p66
        $region58: #{tpu_custom_call.1} parent=55 // pred_check_branch
          %325 = sbr.rel (%p323) target = $region60
        $region59: #{tpu_custom_call.1} parent=55 // pred_region
          %326 = dma.done [#allocation3], 3072
        $region60: #{tpu_custom_call.1} parent=55 // pred_fallthru
          _
        %p327 = scmp.lt.s32.totalorder %s24, 1
        %s328 = scalar_select %p327, %s24, 1
        %s329 = smul.addr %s328, 10
        %s330 = smul.addr %s329, 4
        %s331 = scalar_lea.vmem %s0, %s330
        %p332 = pneg %p45
        %p333 = pneg %p42
        %p334 = pneg %p66
        %p335 = pneg %p63
        %p336 = pneg %p87
        %p337 = pneg %p84
        %p338 = pneg %p108
        %p339 = pneg %p105
        %p340 = pneg %p129
        %p341 = pneg %p126
        %p342 = pneg %p150
        %p343 = pneg %p147
        %p344 = pneg %p171
        %p345 = pneg %p168
        %p346 = scmp.lt.s32.totalorder %s24, 1
        %s347 = scalar_select %p346, %s24, 1
        %s348 = scalar_lea.vmem %s7, %s347
        %p349 = pneg %p197
        %p350 = pneg %p194
        %p351 = scmp.lt.s32.totalorder %s24, 1
        %s352 = scalar_select %p351, %s24, 1
        %s353 = scalar_lea.vmem %s8, %s352
        %p354 = pneg %p223
        %p355 = pneg %p220
        %p356 = pneg %p249
        %p357 = pneg %p246
        %s358 = sand.u32 %s236, 1
        %s359 = scalar_lea.sflag [#allocation4], %s358
        %s360 = sand.u32 %s236, 1
        %s361 = smul.addr %s360, 64
        %s362 = scalar_lea.vmem [#allocation5], %s361
        %p363 = scmp.lt.s32.totalorder %s24, 1
        %s364 = scalar_select %p363, %s24, 1
        %s365 = smul.addr %s364, 10
        %s366 = smul.addr %s365, 4
        %s367 = scalar_lea.vmem %s0, %s366
        %p368 = scmp.lt.s32.totalorder %s24, 1
        %s369 = scalar_select %p368, %s24, 1
        %s370 = scalar_lea.vmem %s7, %s369
        %p371 = scmp.lt.s32.totalorder %s24, 1
        %s372 = scalar_select %p371, %s24, 1
        %s373 = scalar_lea.vmem %s8, %s372
        %v375 = vld [vmem:[%s367] sm:$0xf]
        %v376 = vld [vmem:[%s367 + $0x4] sm:$0xf]
        %v377 = vld [vmem:[%s367 + $0x8] sm:$0xf]
        %v378 = vld [vmem:[%s367 + $0xc] sm:$0xf]
        %v379 = vld [vmem:[%s367 + $0x10] sm:$0xf]
        %v380 = vld [vmem:[%s367 + $0x14] sm:$0xf]
        %v381 = vld [vmem:[%s367 + $0x18] sm:$0xf]
        %v382 = vld [vmem:[%s367 + $0x1c] sm:$0xf]
        %v383 = vld [vmem:[#allocation2] sm:$0xf]
        %v384 = vld [vmem:[#allocation2 + $0x4] sm:$0xf]
        %v385 = vld [vmem:[#allocation2 + $0x8] sm:$0xf]
        %v386 = vld [vmem:[#allocation2 + $0xc] sm:$0xf]
        %v387 = vld [vmem:[#allocation2 + $0x10] sm:$0xf]
        %v388 = vld [vmem:[#allocation2 + $0x14] sm:$0xf]
        %v389 = vld [vmem:[#allocation2 + $0x18] sm:$0xf]
        %v390 = vld [vmem:[#allocation2 + $0x1c] sm:$0xf]
        %v391 = vld [vmem:[#allocation2 + $0x20] sm:$0xf]
        %v392 = vld [vmem:[#allocation2 + $0x24] sm:$0xf]
        %v393 = vld [vmem:[#allocation2 + $0x28] sm:$0xf]
        %v394 = vld [vmem:[#allocation2 + $0x2c] sm:$0xf]
        %v395 = vld [vmem:[#allocation2 + $0x30] sm:$0xf]
        %v396 = vld [vmem:[#allocation2 + $0x34] sm:$0xf]
        %v397 = vld [vmem:[#allocation2 + $0x38] sm:$0xf]
        %v398 = vld [vmem:[#allocation2 + $0x3c] sm:$0xf]
        %s399 = scalar_lea.vmem %s367, 4
        %v400 = vld [vmem:[%s399] sm:$0xf]
        %v401 = vld [vmem:[%s399 + $0x4] sm:$0xf]
        %v402 = vld [vmem:[%s399 + $0x8] sm:$0xf]
        %v403 = vld [vmem:[%s399 + $0xc] sm:$0xf]
        %v404 = vld [vmem:[%s399 + $0x10] sm:$0xf]
        %v405 = vld [vmem:[%s399 + $0x14] sm:$0xf]
        %v406 = vld [vmem:[%s399 + $0x18] sm:$0xf]
        %v407 = vld [vmem:[%s399 + $0x1c] sm:$0xf]
        %s408 = scalar_lea.vmem [#allocation2], 64
        %v409 = vld [vmem:[%s408] sm:$0xf]
        %v410 = vld [vmem:[%s408 + $0x4] sm:$0xf]
        %v411 = vld [vmem:[%s408 + $0x8] sm:$0xf]
        %v412 = vld [vmem:[%s408 + $0xc] sm:$0xf]
        %v413 = vld [vmem:[%s408 + $0x10] sm:$0xf]
        %v414 = vld [vmem:[%s408 + $0x14] sm:$0xf]
        %v415 = vld [vmem:[%s408 + $0x18] sm:$0xf]
        %v416 = vld [vmem:[%s408 + $0x1c] sm:$0xf]
        %v417 = vld [vmem:[%s408 + $0x20] sm:$0xf]
        %v418 = vld [vmem:[%s408 + $0x24] sm:$0xf]
        %v419 = vld [vmem:[%s408 + $0x28] sm:$0xf]
        %v420 = vld [vmem:[%s408 + $0x2c] sm:$0xf]
        %v421 = vld [vmem:[%s408 + $0x30] sm:$0xf]
        %v422 = vld [vmem:[%s408 + $0x34] sm:$0xf]
        %v423 = vld [vmem:[%s408 + $0x38] sm:$0xf]
        %v424 = vld [vmem:[%s408 + $0x3c] sm:$0xf]
        %v433 = vunpack.c.l.b16 %v400
        %v434 = vunpack.c.l.b16 %v401
        %v435 = vunpack.c.l.b16 %v402
        %v436 = vunpack.c.l.b16 %v403
        %v437 = vunpack.c.l.b16 %v404
        %v438 = vunpack.c.l.b16 %v405
        %v439 = vunpack.c.l.b16 %v406
        %v440 = vunpack.c.l.b16 %v407
        %v441 = vpack.c.b16 %v434, %v433
        %v442 = vpack.c.b16 %v436, %v435
        %v443 = vpack.c.b16 %v438, %v437
        %v444 = vpack.c.b16 %v440, %v439
        %v465 = vunpack.c.l.b16 %v409
        %v466 = vunpack.c.l.b16 %v410
        %v467 = vunpack.c.l.b16 %v411
        %v468 = vunpack.c.l.b16 %v412
        %v469 = vunpack.c.l.b16 %v413
        %v470 = vunpack.c.l.b16 %v414
        %v471 = vunpack.c.l.b16 %v415
        %v472 = vunpack.c.l.b16 %v416
        %v473 = vunpack.c.l.b16 %v417
        %v474 = vunpack.c.l.b16 %v418
        %v475 = vunpack.c.l.b16 %v419
        %v476 = vunpack.c.l.b16 %v420
        %v477 = vunpack.c.l.b16 %v421
        %v478 = vunpack.c.l.b16 %v422
        %v479 = vunpack.c.l.b16 %v423
        %v480 = vunpack.c.l.b16 %v424
        %v481 = vpack.c.b16 %v466, %v465
        %v482 = vpack.c.b16 %v468, %v467
        %v483 = vpack.c.b16 %v470, %v469
        %v484 = vpack.c.b16 %v472, %v471
        %v485 = vpack.c.b16 %v474, %v473
        %v486 = vpack.c.b16 %v476, %v475
        %v487 = vpack.c.b16 %v478, %v477
        %v488 = vpack.c.b16 %v480, %v479
        %497 = vmatprep.subr.bf16.mxu0 0
        %498 = vmatpush1.bf16.msra.mxu0 %v488
        %499 = vmatprep.subr.bf16.mxu0 0
        %500 = vmatpush1.bf16.msra.mxu0 %v487
        %501 = vmatprep.subr.bf16.mxu0 0
        %502 = vmatpush1.bf16.msra.mxu0 %v486
        %503 = vmatprep.subr.bf16.mxu0 0
        %504 = vmatpush1.bf16.msra.mxu0 %v485
        %505 = vmatprep.subr.bf16.mxu0 0
        %506 = vmatpush1.bf16.msra.mxu0 %v484
        %507 = vmatprep.subr.bf16.mxu0 0
        %508 = vmatpush1.bf16.msra.mxu0 %v483
        %509 = vmatprep.subr.bf16.mxu0 0
        %510 = vmatpush1.bf16.msra.mxu0 %v482
        %511 = vmatprep.subr.bf16.mxu0 0
        %512 = vmatpush1.bf16.msra.mxu0 %v481
        %513 = vmatprep.subr.bf16.mxu0 0
        %514 = vmatpush2.bf16.msra.mxu0 0
        %515 = vmatprep.subr.bf16.mxu0 0
        %516 = vmatpush2.bf16.msra.mxu0 0
        %517 = vmatprep.subr.bf16.mxu0 0
        %518 = vmatpush2.bf16.msra.mxu0 0
        %519 = vmatprep.subr.bf16.mxu0 0
        %520 = vmatpush2.bf16.msra.mxu0 0
        %521 = vmatprep.subr.bf16.mxu0 0
        %522 = vmatpush2.bf16.msra.mxu0 0
        %523 = vmatprep.subr.bf16.mxu0 0
        %524 = vmatpush2.bf16.msra.mxu0 0
        %525 = vmatprep.subr.bf16.mxu0 0
        %526 = vmatpush2.bf16.msra.mxu0 0
        %527 = vmatprep.subr.bf16.mxu0 0
        %528 = vmatpush2.bf16.msra.mxu0 0
        %529 = vmatprep.mubr.bf16.mxu0 0
        %530 = vmatmul.mubr.bf16.gmra.mxu0 %v441
        %v531 = vpop.f32.mrf.mxu0
        %v532 = vadd.f32 0.0, %v531
        %v533 = vpop.f32.mrf.mxu0
        %v534 = vpop.f32.mrf.mxu0
        %v535 = vadd.f32 0.0, %v534
        %v536 = vpop.f32.mrf.mxu0
        %537 = vmatprep.mubr.bf16.mxu0 0
        %538 = vmatmul.mubr.bf16.gmra.mxu0 %v442
        %v539 = vpop.f32.mrf.mxu0
        %v540 = vadd.f32 0.0, %v539
        %v541 = vpop.f32.mrf.mxu0
        %v542 = vpop.f32.mrf.mxu0
        %v543 = vadd.f32 0.0, %v542
        %v544 = vpop.f32.mrf.mxu0
        %545 = vmatprep.mubr.bf16.mxu0 0
        %546 = vmatmul.mubr.bf16.gmra.mxu0 %v443
        %v547 = vpop.f32.mrf.mxu0
        %v548 = vadd.f32 0.0, %v547
        %v549 = vpop.f32.mrf.mxu0
        %v550 = vpop.f32.mrf.mxu0
        %v551 = vadd.f32 0.0, %v550
        %v552 = vpop.f32.mrf.mxu0
        %553 = vmatprep.mubr.bf16.mxu0 0
        %554 = vmatmul.mubr.bf16.gmra.mxu0 %v444
        %v555 = vpop.f32.mrf.mxu0
        %v556 = vadd.f32 0.0, %v555
        %v557 = vpop.f32.mrf.mxu0
        %v558 = vpop.f32.mrf.mxu0
        %v559 = vadd.f32 0.0, %v558
        %v560 = vpop.f32.mrf.mxu0
        %561 = vdwg.mxu0
        %v570 = vunpack.c.l.b16 %v375
        %v571 = vunpack.c.l.b16 %v376
        %v572 = vunpack.c.l.b16 %v377
        %v573 = vunpack.c.l.b16 %v378
        %v574 = vunpack.c.l.b16 %v379
        %v575 = vunpack.c.l.b16 %v380
        %v576 = vunpack.c.l.b16 %v381
        %v577 = vunpack.c.l.b16 %v382
        %v578 = vpack.c.b16 %v571, %v570
        %v579 = vpack.c.b16 %v573, %v572
        %v580 = vpack.c.b16 %v575, %v574
        %v581 = vpack.c.b16 %v577, %v576
        %v602 = vunpack.c.l.b16 %v383
        %v603 = vunpack.c.l.b16 %v384
        %v604 = vunpack.c.l.b16 %v385
        %v605 = vunpack.c.l.b16 %v386
        %v606 = vunpack.c.l.b16 %v387
        %v607 = vunpack.c.l.b16 %v388
        %v608 = vunpack.c.l.b16 %v389
        %v609 = vunpack.c.l.b16 %v390
        %v610 = vunpack.c.l.b16 %v391
        %v611 = vunpack.c.l.b16 %v392
        %v612 = vunpack.c.l.b16 %v393
        %v613 = vunpack.c.l.b16 %v394
        %v614 = vunpack.c.l.b16 %v395
        %v615 = vunpack.c.l.b16 %v396
        %v616 = vunpack.c.l.b16 %v397
        %v617 = vunpack.c.l.b16 %v398
        %v618 = vpack.c.b16 %v603, %v602
        %v619 = vpack.c.b16 %v605, %v604
        %v620 = vpack.c.b16 %v607, %v606
        %v621 = vpack.c.b16 %v609, %v608
        %v622 = vpack.c.b16 %v611, %v610
        %v623 = vpack.c.b16 %v613, %v612
        %v624 = vpack.c.b16 %v615, %v614
        %v625 = vpack.c.b16 %v617, %v616
        %634 = vmatprep.subr.bf16.mxu0 0
        %635 = vmatpush1.bf16.msra.mxu0 %v625
        %636 = vmatprep.subr.bf16.mxu0 0
        %637 = vmatpush1.bf16.msra.mxu0 %v624
        %638 = vmatprep.subr.bf16.mxu0 0
        %639 = vmatpush1.bf16.msra.mxu0 %v623
        %640 = vmatprep.subr.bf16.mxu0 0
        %641 = vmatpush1.bf16.msra.mxu0 %v622
        %642 = vmatprep.subr.bf16.mxu0 0
        %643 = vmatpush1.bf16.msra.mxu0 %v621
        %644 = vmatprep.subr.bf16.mxu0 0
        %645 = vmatpush1.bf16.msra.mxu0 %v620
        %646 = vmatprep.subr.bf16.mxu0 0
        %647 = vmatpush1.bf16.msra.mxu0 %v619
        %648 = vmatprep.subr.bf16.mxu0 0
        %649 = vmatpush1.bf16.msra.mxu0 %v618
        %650 = vmatprep.subr.bf16.mxu0 0
        %651 = vmatpush2.bf16.msra.mxu0 0
        %652 = vmatprep.subr.bf16.mxu0 0
        %653 = vmatpush2.bf16.msra.mxu0 0
        %654 = vmatprep.subr.bf16.mxu0 0
        %655 = vmatpush2.bf16.msra.mxu0 0
        %656 = vmatprep.subr.bf16.mxu0 0
        %657 = vmatpush2.bf16.msra.mxu0 0
        %658 = vmatprep.subr.bf16.mxu0 0
        %659 = vmatpush2.bf16.msra.mxu0 0
        %660 = vmatprep.subr.bf16.mxu0 0
        %661 = vmatpush2.bf16.msra.mxu0 0
        %662 = vmatprep.subr.bf16.mxu0 0
        %663 = vmatpush2.bf16.msra.mxu0 0
        %664 = vmatprep.subr.bf16.mxu0 0
        %665 = vmatpush2.bf16.msra.mxu0 0
        %666 = vmatprep.mubr.bf16.mxu0 0
        %667 = vmatmul.mubr.bf16.gmra.mxu0 %v578
        %v668 = vpop.f32.mrf.mxu0
        %v669 = vadd.f32 %v532, %v668
        %v670 = vpop.f32.mrf.mxu0
        %v671 = vpop.f32.mrf.mxu0
        %v672 = vadd.f32 %v535, %v671
        %v673 = vpop.f32.mrf.mxu0
        %674 = vmatprep.mubr.bf16.mxu0 0
        %675 = vmatmul.mubr.bf16.gmra.mxu0 %v579
        %v676 = vpop.f32.mrf.mxu0
        %v677 = vadd.f32 %v540, %v676
        %v678 = vpop.f32.mrf.mxu0
        %v679 = vpop.f32.mrf.mxu0
        %v680 = vadd.f32 %v543, %v679
        %v681 = vpop.f32.mrf.mxu0
        %682 = vmatprep.mubr.bf16.mxu0 0
        %683 = vmatmul.mubr.bf16.gmra.mxu0 %v580
        %v684 = vpop.f32.mrf.mxu0
        %v685 = vadd.f32 %v548, %v684
        %v686 = vpop.f32.mrf.mxu0
        %v687 = vpop.f32.mrf.mxu0
        %v688 = vadd.f32 %v551, %v687
        %v689 = vpop.f32.mrf.mxu0
        %690 = vmatprep.mubr.bf16.mxu0 0
        %691 = vmatmul.mubr.bf16.gmra.mxu0 %v581
        %v692 = vpop.f32.mrf.mxu0
        %v693 = vadd.f32 %v556, %v692
        %v694 = vpop.f32.mrf.mxu0
        %v695 = vpop.f32.mrf.mxu0
        %v696 = vadd.f32 %v559, %v695
        %v697 = vpop.f32.mrf.mxu0
        %698 = vdwg.mxu0
        %s699 = scalar_lea.vmem %s367, 8
        %v700 = vld [vmem:[%s699] sm:$0xf]
        %v701 = vld [vmem:[%s699 + $0x4] sm:$0xf]
        %v702 = vld [vmem:[%s699 + $0x8] sm:$0xf]
        %v703 = vld [vmem:[%s699 + $0xc] sm:$0xf]
        %v704 = vld [vmem:[%s699 + $0x10] sm:$0xf]
        %v705 = vld [vmem:[%s699 + $0x14] sm:$0xf]
        %v706 = vld [vmem:[%s699 + $0x18] sm:$0xf]
        %v707 = vld [vmem:[%s699 + $0x1c] sm:$0xf]
        %s708 = scalar_lea.vmem [#allocation2], 128
        %v709 = vld [vmem:[%s708] sm:$0xf]
        %v710 = vld [vmem:[%s708 + $0x4] sm:$0xf]
        %v711 = vld [vmem:[%s708 + $0x8] sm:$0xf]
        %v712 = vld [vmem:[%s708 + $0xc] sm:$0xf]
        %v713 = vld [vmem:[%s708 + $0x10] sm:$0xf]
        %v714 = vld [vmem:[%s708 + $0x14] sm:$0xf]
        %v715 = vld [vmem:[%s708 + $0x18] sm:$0xf]
        %v716 = vld [vmem:[%s708 + $0x1c] sm:$0xf]
        %v717 = vld [vmem:[%s708 + $0x20] sm:$0xf]
        %v718 = vld [vmem:[%s708 + $0x24] sm:$0xf]
        %v719 = vld [vmem:[%s708 + $0x28] sm:$0xf]
        %v720 = vld [vmem:[%s708 + $0x2c] sm:$0xf]
        %v721 = vld [vmem:[%s708 + $0x30] sm:$0xf]
        %v722 = vld [vmem:[%s708 + $0x34] sm:$0xf]
        %v723 = vld [vmem:[%s708 + $0x38] sm:$0xf]
        %v724 = vld [vmem:[%s708 + $0x3c] sm:$0xf]
        %v733 = vunpack.c.l.b16 %v700
        %v734 = vunpack.c.l.b16 %v701
        %v735 = vunpack.c.l.b16 %v702
        %v736 = vunpack.c.l.b16 %v703
        %v737 = vunpack.c.l.b16 %v704
        %v738 = vunpack.c.l.b16 %v705
        %v739 = vunpack.c.l.b16 %v706
        %v740 = vunpack.c.l.b16 %v707
        %v741 = vpack.c.b16 %v734, %v733
        %v742 = vpack.c.b16 %v736, %v735
        %v743 = vpack.c.b16 %v738, %v737
        %v744 = vpack.c.b16 %v740, %v739
        %v765 = vunpack.c.l.b16 %v709
        %v766 = vunpack.c.l.b16 %v710
        %v767 = vunpack.c.l.b16 %v711
        %v768 = vunpack.c.l.b16 %v712
        %v769 = vunpack.c.l.b16 %v713
        %v770 = vunpack.c.l.b16 %v714
        %v771 = vunpack.c.l.b16 %v715
        %v772 = vunpack.c.l.b16 %v716
        %v773 = vunpack.c.l.b16 %v717
        %v774 = vunpack.c.l.b16 %v718
        %v775 = vunpack.c.l.b16 %v719
        %v776 = vunpack.c.l.b16 %v720
        %v777 = vunpack.c.l.b16 %v721
        %v778 = vunpack.c.l.b16 %v722
        %v779 = vunpack.c.l.b16 %v723
        %v780 = vunpack.c.l.b16 %v724
        %v781 = vpack.c.b16 %v766, %v765
        %v782 = vpack.c.b16 %v768, %v767
        %v783 = vpack.c.b16 %v770, %v769
        %v784 = vpack.c.b16 %v772, %v771
        %v785 = vpack.c.b16 %v774, %v773
        %v786 = vpack.c.b16 %v776, %v775
        %v787 = vpack.c.b16 %v778, %v777
        %v788 = vpack.c.b16 %v780, %v779
        %797 = vmatprep.subr.bf16.mxu0 0
        %798 = vmatpush1.bf16.msra.mxu0 %v788
        %799 = vmatprep.subr.bf16.mxu0 0
        %800 = vmatpush1.bf16.msra.mxu0 %v787
        %801 = vmatprep.subr.bf16.mxu0 0
        %802 = vmatpush1.bf16.msra.mxu0 %v786
        %803 = vmatprep.subr.bf16.mxu0 0
        %804 = vmatpush1.bf16.msra.mxu0 %v785
        %805 = vmatprep.subr.bf16.mxu0 0
        %806 = vmatpush1.bf16.msra.mxu0 %v784
        %807 = vmatprep.subr.bf16.mxu0 0
        %808 = vmatpush1.bf16.msra.mxu0 %v783
        %809 = vmatprep.subr.bf16.mxu0 0
        %810 = vmatpush1.bf16.msra.mxu0 %v782
        %811 = vmatprep.subr.bf16.mxu0 0
        %812 = vmatpush1.bf16.msra.mxu0 %v781
        %813 = vmatprep.subr.bf16.mxu0 0
        %814 = vmatpush2.bf16.msra.mxu0 0
        %815 = vmatprep.subr.bf16.mxu0 0
        %816 = vmatpush2.bf16.msra.mxu0 0
        %817 = vmatprep.subr.bf16.mxu0 0
        %818 = vmatpush2.bf16.msra.mxu0 0
        %819 = vmatprep.subr.bf16.mxu0 0
        %820 = vmatpush2.bf16.msra.mxu0 0
        %821 = vmatprep.subr.bf16.mxu0 0
        %822 = vmatpush2.bf16.msra.mxu0 0
        %823 = vmatprep.subr.bf16.mxu0 0
        %824 = vmatpush2.bf16.msra.mxu0 0
        %825 = vmatprep.subr.bf16.mxu0 0
        %826 = vmatpush2.bf16.msra.mxu0 0
        %827 = vmatprep.subr.bf16.mxu0 0
        %828 = vmatpush2.bf16.msra.mxu0 0
        %829 = vmatprep.mubr.bf16.mxu0 0
        %830 = vmatmul.mubr.bf16.gmra.mxu0 %v741
        %v831 = vpop.f32.mrf.mxu0
        %v832 = vadd.f32 0.0, %v831
        %v833 = vpop.f32.mrf.mxu0
        %v834 = vpop.f32.mrf.mxu0
        %v835 = vadd.f32 0.0, %v834
        %v836 = vpop.f32.mrf.mxu0
        %837 = vmatprep.mubr.bf16.mxu0 0
        %838 = vmatmul.mubr.bf16.gmra.mxu0 %v742
        %v839 = vpop.f32.mrf.mxu0
        %v840 = vadd.f32 0.0, %v839
        %v841 = vpop.f32.mrf.mxu0
        %v842 = vpop.f32.mrf.mxu0
        %v843 = vadd.f32 0.0, %v842
        %v844 = vpop.f32.mrf.mxu0
        %845 = vmatprep.mubr.bf16.mxu0 0
        %846 = vmatmul.mubr.bf16.gmra.mxu0 %v743
        %v847 = vpop.f32.mrf.mxu0
        %v848 = vadd.f32 0.0, %v847
        %v849 = vpop.f32.mrf.mxu0
        %v850 = vpop.f32.mrf.mxu0
        %v851 = vadd.f32 0.0, %v850
        %v852 = vpop.f32.mrf.mxu0
        %853 = vmatprep.mubr.bf16.mxu0 0
        %854 = vmatmul.mubr.bf16.gmra.mxu0 %v744
        %v855 = vpop.f32.mrf.mxu0
        %v856 = vadd.f32 0.0, %v855
        %v857 = vpop.f32.mrf.mxu0
        %v858 = vpop.f32.mrf.mxu0
        %v859 = vadd.f32 0.0, %v858
        %v860 = vpop.f32.mrf.mxu0
        %861 = vdwg.mxu0
        %v862 = vadd.f32 %v669, %v832
        %v863 = vadd.f32 %v672, %v835
        %v864 = vadd.f32 %v677, %v840
        %v865 = vadd.f32 %v680, %v843
        %v866 = vadd.f32 %v685, %v848
        %v867 = vadd.f32 %v688, %v851
        %v868 = vadd.f32 %v693, %v856
        %v869 = vadd.f32 %v696, %v859
        %v870 = vld [vmem:[%s2] sm:$0x1]
        %v871 = vadd.f32 %v862, %v863
        %v872 = vadd.f32 %v871, %v864
        %v873 = vadd.f32 %v872, %v865
        %v874 = vadd.f32 %v873, %v866
        %v875 = vadd.f32 %v874, %v867
        %v876 = vadd.f32 %v875, %v868
        %v877 = vadd.f32 %v876, %v869
        %v878 = vrot.slane %v877, 4
        %v879 = vadd.f32 %v877, %v878
        %v880 = vrot.slane %v879, 2
        %v881 = vadd.f32 %v879, %v880
        %v882 = vrot.slane %v881, 1
        %v883 = vadd.f32 %v881, %v882
        %v884 = vmul.f32 %v862, %v862
        %v885 = vmul.f32 %v863, %v863
        %v886 = vmul.f32 %v864, %v864
        %v887 = vmul.f32 %v865, %v865
        %v888 = vmul.f32 %v866, %v866
        %v889 = vmul.f32 %v867, %v867
        %v890 = vmul.f32 %v868, %v868
        %v891 = vmul.f32 %v869, %v869
        %v892 = vadd.f32 %v884, %v885
        %v893 = vadd.f32 %v892, %v886
        %v894 = vadd.f32 %v893, %v887
        %v895 = vadd.f32 %v894, %v888
        %v896 = vadd.f32 %v895, %v889
        %v897 = vadd.f32 %v896, %v890
        %v898 = vadd.f32 %v897, %v891
        %v899 = vrot.slane %v898, 4
        %v900 = vadd.f32 %v898, %v899
        %v901 = vrot.slane %v900, 2
        %v902 = vadd.f32 %v900, %v901
        %v903 = vrot.slane %v902, 1
        %v904 = vadd.f32 %v902, %v903
        %v905 = vmul.f32 %v870, 64.0
        %v906 = vadd.f32 %v883, %v905
        %v907 = vmul.f32 %v870, 2.0
        %v908 = vmul.f32 %v907, %v883
        %v909 = vadd.f32 %v904, %v908
        %v910 = vmul.f32 %v905, %v870
        %v911 = vadd.f32 %v909, %v910
        %v912 = vld [vmem:[%s5] sm:$0xff]
        %v913 = vld [vmem:[%s5 + $0x8] sm:$0xff]
        %v914 = vld [vmem:[%s5 + $0x10] sm:$0xff]
        %v915 = vld [vmem:[%s5 + $0x18] sm:$0xff]
        %v916 = vld [vmem:[%s5 + $0x20] sm:$0xff]
        %v917 = vld [vmem:[%s5 + $0x28] sm:$0xff]
        %v918 = vld [vmem:[%s5 + $0x30] sm:$0xff]
        %v919 = vld [vmem:[%s5 + $0x38] sm:$0xff]
        %v920 = vld [vmem:[%s5 + $0x40] sm:$0xff]
        %v921 = vld [vmem:[%s5 + $0x48] sm:$0xff]
        %v922 = vld [vmem:[%s5 + $0x50] sm:$0xff]
        %v923 = vld [vmem:[%s5 + $0x58] sm:$0xff]
        %v924 = vld [vmem:[%s5 + $0x60] sm:$0xff]
        %v925 = vld [vmem:[%s5 + $0x68] sm:$0xff]
        %v926 = vld [vmem:[%s5 + $0x70] sm:$0xff]
        %v927 = vld [vmem:[%s5 + $0x78] sm:$0xff]
        %928 = vmatprep.subr.mxu0 0.0
        %929 = vmatpush1.msra.mxu0 %v927
        %930 = vmatprep.subr.mxu0 0.0
        %931 = vmatpush1.msra.mxu0 %v926
        %932 = vmatprep.subr.mxu0 0.0
        %933 = vmatpush1.msra.mxu0 %v925
        %934 = vmatprep.subr.mxu0 0.0
        %935 = vmatpush1.msra.mxu0 %v924
        %936 = vmatprep.subr.mxu0 0.0
        %937 = vmatpush1.msra.mxu0 %v923
        %938 = vmatprep.subr.mxu0 0.0
        %939 = vmatpush1.msra.mxu0 %v922
        %940 = vmatprep.subr.mxu0 0.0
        %941 = vmatpush1.msra.mxu0 %v921
        %942 = vmatprep.subr.mxu0 0.0
        %943 = vmatpush1.msra.mxu0 %v920
        %944 = vmatprep.subr.mxu0 0.0
        %945 = vmatpush1.msra.mxu0 %v919
        %946 = vmatprep.subr.mxu0 0.0
        %947 = vmatpush1.msra.mxu0 %v918
        %948 = vmatprep.subr.mxu0 0.0
        %949 = vmatpush1.msra.mxu0 %v917
        %950 = vmatprep.subr.mxu0 0.0
        %951 = vmatpush1.msra.mxu0 %v916
        %952 = vmatprep.subr.mxu0 0.0
        %953 = vmatpush1.msra.mxu0 %v915
        %954 = vmatprep.subr.mxu0 0.0
        %955 = vmatpush1.msra.mxu0 %v914
        %956 = vmatprep.subr.mxu0 0.0
        %957 = vmatpush1.msra.mxu0 %v913
        %958 = vmatprep.subr.mxu0 0.0
        %959 = vmatpush1.msra.mxu0 %v912
        %960 = vmatprep.subr.mxu0 0.0
        %961 = vmatpush2.msra.mxu0 0.0
        %962 = vmatprep.subr.mxu0 0.0
        %963 = vmatpush2.msra.mxu0 0.0
        %964 = vmatprep.subr.mxu0 0.0
        %965 = vmatpush2.msra.mxu0 0.0
        %966 = vmatprep.subr.mxu0 0.0
        %967 = vmatpush2.msra.mxu0 0.0
        %968 = vmatprep.subr.mxu0 0.0
        %969 = vmatpush2.msra.mxu0 0.0
        %970 = vmatprep.subr.mxu0 0.0
        %971 = vmatpush2.msra.mxu0 0.0
        %972 = vmatprep.subr.mxu0 0.0
        %973 = vmatpush2.msra.mxu0 0.0
        %974 = vmatprep.subr.mxu0 0.0
        %975 = vmatpush2.msra.mxu0 0.0
        %976 = vmatprep.subr.mxu0 0.0
        %977 = vmatpush2.msra.mxu0 0.0
        %978 = vmatprep.subr.mxu0 0.0
        %979 = vmatpush2.msra.mxu0 0.0
        %980 = vmatprep.subr.mxu0 0.0
        %981 = vmatpush2.msra.mxu0 0.0
        %982 = vmatprep.subr.mxu0 0.0
        %983 = vmatpush2.msra.mxu0 0.0
        %984 = vmatprep.subr.mxu0 0.0
        %985 = vmatpush2.msra.mxu0 0.0
        %986 = vmatprep.subr.mxu0 0.0
        %987 = vmatpush2.msra.mxu0 0.0
        %988 = vmatprep.subr.mxu0 0.0
        %989 = vmatpush2.msra.mxu0 0.0
        %990 = vmatprep.subr.mxu0 0.0
        %991 = vmatpush2.msra.mxu0 0.0
        %992 = vmatprep.mubr.f32.mxu0 0.0
        %993 = vmatmul.mubr.f32.gmra.mxu0 %v906
        %v994 = vpop.f32.mrf.mxu0
        %v995 = vadd.f32 0.0, %v994
        %v996 = vpop.f32.mrf.mxu0
        %997 = vdwg.mxu0
        %v998 = vld [vmem:[%s6] sm:$0xff]
        %vm999 = vcmask 64512
        %v1001 = vsel %vm999, %v995, 0
        %1003 = vmatprep.subr.mxu0 0.0
        %1004 = vmatpush1.msra.mxu0 0.0
        %1005 = vmatprep.subr.mxu0 0.0
        %1006 = vmatpush1.msra.mxu0 0.0
        %1007 = vmatprep.subr.mxu0 0.0
        %1008 = vmatpush1.msra.mxu0 0.0
        %1009 = vmatprep.subr.mxu0 0.0
        %1010 = vmatpush1.msra.mxu0 0.0
        %1011 = vmatprep.subr.mxu0 0.0
        %1012 = vmatpush1.msra.mxu0 0.0
        %1013 = vmatprep.subr.mxu0 0.0
        %1014 = vmatpush1.msra.mxu0 0.0
        %1015 = vmatprep.subr.mxu0 0.0
        %1016 = vmatpush1.msra.mxu0 0.0
        %1017 = vmatprep.subr.mxu0 0.0
        %1018 = vmatpush1.msra.mxu0 0.0
        %1019 = vmatprep.subr.mxu0 0.0
        %1020 = vmatpush1.msra.mxu0 0.0
        %1021 = vmatprep.subr.mxu0 0.0
        %1022 = vmatpush1.msra.mxu0 0.0
        %1023 = vmatprep.subr.mxu0 0.0
        %1024 = vmatpush1.msra.mxu0 0.0
        %1025 = vmatprep.subr.mxu0 0.0
        %1026 = vmatpush1.msra.mxu0 0.0
        %1027 = vmatprep.subr.mxu0 0.0
        %1028 = vmatpush1.msra.mxu0 0.0
        %1029 = vmatprep.subr.mxu0 0.0
        %1030 = vmatpush1.msra.mxu0 0.0
        %1031 = vmatprep.subr.mxu0 0.0
        %1032 = vmatpush1.msra.mxu0 0.0
        %1033 = vmatprep.subr.mxu0 0.0
        %1034 = vmatpush1.msra.mxu0 %v998
        %1035 = vmatprep.subr.mxu0 0.0
        %1036 = vmatpush2.msra.mxu0 0.0
        %1037 = vmatprep.subr.mxu0 0.0
        %1038 = vmatpush2.msra.mxu0 0.0
        %1039 = vmatprep.subr.mxu0 0.0
        %1040 = vmatpush2.msra.mxu0 0.0
        %1041 = vmatprep.subr.mxu0 0.0
        %1042 = vmatpush2.msra.mxu0 0.0
        %1043 = vmatprep.subr.mxu0 0.0
        %1044 = vmatpush2.msra.mxu0 0.0
        %1045 = vmatprep.subr.mxu0 0.0
        %1046 = vmatpush2.msra.mxu0 0.0
        %1047 = vmatprep.subr.mxu0 0.0
        %1048 = vmatpush2.msra.mxu0 0.0
        %1049 = vmatprep.subr.mxu0 0.0
        %1050 = vmatpush2.msra.mxu0 0.0
        %1051 = vmatprep.subr.mxu0 0.0
        %1052 = vmatpush2.msra.mxu0 0.0
        %1053 = vmatprep.subr.mxu0 0.0
        %1054 = vmatpush2.msra.mxu0 0.0
        %1055 = vmatprep.subr.mxu0 0.0
        %1056 = vmatpush2.msra.mxu0 0.0
        %1057 = vmatprep.subr.mxu0 0.0
        %1058 = vmatpush2.msra.mxu0 0.0
        %1059 = vmatprep.subr.mxu0 0.0
        %1060 = vmatpush2.msra.mxu0 0.0
        %1061 = vmatprep.subr.mxu0 0.0
        %1062 = vmatpush2.msra.mxu0 0.0
        %1063 = vmatprep.subr.mxu0 0.0
        %1064 = vmatpush2.msra.mxu0 0.0
        %1065 = vmatprep.subr.mxu0 0.0
        %1066 = vmatpush2.msra.mxu0 0.0
        %1067 = vmatprep.mubr.f32.mxu0 0.0
        %1068 = vmatmul.mubr.f32.gmra.mxu0 %v1001
        %v1069 = vpop.f32.mrf.mxu0
        %v1070 = vadd.f32 0.0, %v1069
        %v1071 = vpop.f32.mrf.mxu0
        %1072 = vdwg.mxu0
        %1073 = vmatprep.subr.mxu0 0.0
        %1074 = vmatpush1.msra.mxu0 %v927
        %1075 = vmatprep.subr.mxu0 0.0
        %1076 = vmatpush1.msra.mxu0 %v926
        %1077 = vmatprep.subr.mxu0 0.0
        %1078 = vmatpush1.msra.mxu0 %v925
        %1079 = vmatprep.subr.mxu0 0.0
        %1080 = vmatpush1.msra.mxu0 %v924
        %1081 = vmatprep.subr.mxu0 0.0
        %1082 = vmatpush1.msra.mxu0 %v923
        %1083 = vmatprep.subr.mxu0 0.0
        %1084 = vmatpush1.msra.mxu0 %v922
        %1085 = vmatprep.subr.mxu0 0.0
        %1086 = vmatpush1.msra.mxu0 %v921
        %1087 = vmatprep.subr.mxu0 0.0
        %1088 = vmatpush1.msra.mxu0 %v920
        %1089 = vmatprep.subr.mxu0 0.0
        %1090 = vmatpush1.msra.mxu0 %v919
        %1091 = vmatprep.subr.mxu0 0.0
        %1092 = vmatpush1.msra.mxu0 %v918
        %1093 = vmatprep.subr.mxu0 0.0
        %1094 = vmatpush1.msra.mxu0 %v917
        %1095 = vmatprep.subr.mxu0 0.0
        %1096 = vmatpush1.msra.mxu0 %v916
        %1097 = vmatprep.subr.mxu0 0.0
        %1098 = vmatpush1.msra.mxu0 %v915
        %1099 = vmatprep.subr.mxu0 0.0
        %1100 = vmatpush1.msra.mxu0 %v914
        %1101 = vmatprep.subr.mxu0 0.0
        %1102 = vmatpush1.msra.mxu0 %v913
        %1103 = vmatprep.subr.mxu0 0.0
        %1104 = vmatpush1.msra.mxu0 %v912
        %1105 = vmatprep.subr.mxu0 0.0
        %1106 = vmatpush2.msra.mxu0 0.0
        %1107 = vmatprep.subr.mxu0 0.0
        %1108 = vmatpush2.msra.mxu0 0.0
        %1109 = vmatprep.subr.mxu0 0.0
        %1110 = vmatpush2.msra.mxu0 0.0
        %1111 = vmatprep.subr.mxu0 0.0
        %1112 = vmatpush2.msra.mxu0 0.0
        %1113 = vmatprep.subr.mxu0 0.0
        %1114 = vmatpush2.msra.mxu0 0.0
        %1115 = vmatprep.subr.mxu0 0.0
        %1116 = vmatpush2.msra.mxu0 0.0
        %1117 = vmatprep.subr.mxu0 0.0
        %1118 = vmatpush2.msra.mxu0 0.0
        %1119 = vmatprep.subr.mxu0 0.0
        %1120 = vmatpush2.msra.mxu0 0.0
        %1121 = vmatprep.subr.mxu0 0.0
        %1122 = vmatpush2.msra.mxu0 0.0
        %1123 = vmatprep.subr.mxu0 0.0
        %1124 = vmatpush2.msra.mxu0 0.0
        %1125 = vmatprep.subr.mxu0 0.0
        %1126 = vmatpush2.msra.mxu0 0.0
        %1127 = vmatprep.subr.mxu0 0.0
        %1128 = vmatpush2.msra.mxu0 0.0
        %1129 = vmatprep.subr.mxu0 0.0
        %1130 = vmatpush2.msra.mxu0 0.0
        %1131 = vmatprep.subr.mxu0 0.0
        %1132 = vmatpush2.msra.mxu0 0.0
        %1133 = vmatprep.subr.mxu0 0.0
        %1134 = vmatpush2.msra.mxu0 0.0
        %1135 = vmatprep.subr.mxu0 0.0
        %1136 = vmatpush2.msra.mxu0 0.0
        %1137 = vmatprep.mubr.f32.mxu0 0.0
        %1138 = vmatmul.mubr.f32.gmra.mxu0 %v911
        %v1139 = vpop.f32.mrf.mxu0
        %v1140 = vadd.f32 0.0, %v1139
        %v1141 = vpop.f32.mrf.mxu0
        %1142 = vdwg.mxu0
        %v1144 = vsel %vm999, %v1140, 0
        %1146 = vmatprep.subr.mxu0 0.0
        %1147 = vmatpush1.msra.mxu0 0.0
        %1148 = vmatprep.subr.mxu0 0.0
        %1149 = vmatpush1.msra.mxu0 0.0
        %1150 = vmatprep.subr.mxu0 0.0
        %1151 = vmatpush1.msra.mxu0 0.0
        %1152 = vmatprep.subr.mxu0 0.0
        %1153 = vmatpush1.msra.mxu0 0.0
        %1154 = vmatprep.subr.mxu0 0.0
        %1155 = vmatpush1.msra.mxu0 0.0
        %1156 = vmatprep.subr.mxu0 0.0
        %1157 = vmatpush1.msra.mxu0 0.0
        %1158 = vmatprep.subr.mxu0 0.0
        %1159 = vmatpush1.msra.mxu0 0.0
        %1160 = vmatprep.subr.mxu0 0.0
        %1161 = vmatpush1.msra.mxu0 0.0
        %1162 = vmatprep.subr.mxu0 0.0
        %1163 = vmatpush1.msra.mxu0 0.0
        %1164 = vmatprep.subr.mxu0 0.0
        %1165 = vmatpush1.msra.mxu0 0.0
        %1166 = vmatprep.subr.mxu0 0.0
        %1167 = vmatpush1.msra.mxu0 0.0
        %1168 = vmatprep.subr.mxu0 0.0
        %1169 = vmatpush1.msra.mxu0 0.0
        %1170 = vmatprep.subr.mxu0 0.0
        %1171 = vmatpush1.msra.mxu0 0.0
        %1172 = vmatprep.subr.mxu0 0.0
        %1173 = vmatpush1.msra.mxu0 0.0
        %1174 = vmatprep.subr.mxu0 0.0
        %1175 = vmatpush1.msra.mxu0 0.0
        %1176 = vmatprep.subr.mxu0 0.0
        %1177 = vmatpush1.msra.mxu0 %v998
        %1178 = vmatprep.subr.mxu0 0.0
        %1179 = vmatpush2.msra.mxu0 0.0
        %1180 = vmatprep.subr.mxu0 0.0
        %1181 = vmatpush2.msra.mxu0 0.0
        %1182 = vmatprep.subr.mxu0 0.0
        %1183 = vmatpush2.msra.mxu0 0.0
        %1184 = vmatprep.subr.mxu0 0.0
        %1185 = vmatpush2.msra.mxu0 0.0
        %1186 = vmatprep.subr.mxu0 0.0
        %1187 = vmatpush2.msra.mxu0 0.0
        %1188 = vmatprep.subr.mxu0 0.0
        %1189 = vmatpush2.msra.mxu0 0.0
        %1190 = vmatprep.subr.mxu0 0.0
        %1191 = vmatpush2.msra.mxu0 0.0
        %1192 = vmatprep.subr.mxu0 0.0
        %1193 = vmatpush2.msra.mxu0 0.0
        %1194 = vmatprep.subr.mxu0 0.0
        %1195 = vmatpush2.msra.mxu0 0.0
        %1196 = vmatprep.subr.mxu0 0.0
        %1197 = vmatpush2.msra.mxu0 0.0
        %1198 = vmatprep.subr.mxu0 0.0
        %1199 = vmatpush2.msra.mxu0 0.0
        %1200 = vmatprep.subr.mxu0 0.0
        %1201 = vmatpush2.msra.mxu0 0.0
        %1202 = vmatprep.subr.mxu0 0.0
        %1203 = vmatpush2.msra.mxu0 0.0
        %1204 = vmatprep.subr.mxu0 0.0
        %1205 = vmatpush2.msra.mxu0 0.0
        %1206 = vmatprep.subr.mxu0 0.0
        %1207 = vmatpush2.msra.mxu0 0.0
        %1208 = vmatprep.subr.mxu0 0.0
        %1209 = vmatpush2.msra.mxu0 0.0
        %1210 = vmatprep.mubr.f32.mxu0 0.0
        %1211 = vmatmul.mubr.f32.gmra.mxu0 %v1144
        %v1212 = vpop.f32.mrf.mxu0
        %v1213 = vadd.f32 0.0, %v1212
        %v1214 = vpop.f32.mrf.mxu0
        %1215 = vdwg.mxu0
        %v1216 = vmul.f32 %v1070, %v1070
        %v1217 = vsub.f32 %v1213, %v1216
        %v1218 = vmax.f32 %v1217, 0.0
        %v1219 = vadd.f32 %v1218, 1e-05
        %v1220 = vrsqrt.pop %v1219
        %v1221 = vld [vmem:[%s370] sm:$0x1]
        %v1222 = vadd.f32 %v1221, 1.0
        %v1223 = vld [vmem:[%s3] sm:$0x1]
        %v1224 = vmul.f32 %v1220, %v1223
        %v1225 = vmul.f32 %v1224, %v1222
        %v1226 = vsub.f32 %v870, %v1070
        %v1227 = vmul.f32 %v1226, %v1225
        %v1228 = vld [vmem:[%s4] sm:$0x1]
        %v1229 = vmul.f32 %v1228, %v1222
        %v1230 = vadd.f32 %v1227, %v1229
        %v1231 = vld [vmem:[%s373] sm:$0x1]
        %v1232 = vadd.f32 %v1230, %v1231
        %v1233 = vlaneseq
        %v1234 = vshrl.u32 %v1233, 7
        %v1235 = vsub.s32 0, %v1234
        %v1236 = vrot.slane %v1225, %v1235
        %v1237 = vmul.f32 %v862, %v1236
        %v1238 = vmul.f32 %v863, %v1236
        %v1239 = vmul.f32 %v864, %v1236
        %v1240 = vmul.f32 %v865, %v1236
        %v1241 = vmul.f32 %v866, %v1236
        %v1242 = vmul.f32 %v867, %v1236
        %v1243 = vmul.f32 %v868, %v1236
        %v1244 = vmul.f32 %v869, %v1236
        %v1246 = vlaneseq
        %v1247 = vshrl.u32 %v1246, 7
        %v1248 = vsub.s32 0, %v1247
        %v1249 = vrot.slane %v1232, %v1248
        %v1251 = vadd.f32 %v1237, %v1249
        %v1252 = vadd.f32 %v1238, %v1249
        %v1253 = vadd.f32 %v1239, %v1249
        %v1254 = vadd.f32 %v1240, %v1249
        %v1255 = vadd.f32 %v1241, %v1249
        %v1256 = vadd.f32 %v1242, %v1249
        %v1257 = vadd.f32 %v1243, %v1249
        %v1258 = vadd.f32 %v1244, %v1249
        %v1259 = vsub.f32 0.0, %v1251
        %v1260 = vsub.f32 0.0, %v1252
        %v1261 = vsub.f32 0.0, %v1253
        %v1262 = vsub.f32 0.0, %v1254
        %v1263 = vsub.f32 0.0, %v1255
        %v1264 = vsub.f32 0.0, %v1256
        %v1265 = vsub.f32 0.0, %v1257
        %v1266 = vsub.f32 0.0, %v1258
        %v1267 = vmul.f32 %v1259, 1.442695
        %v1268 = vpow.pop %v1267
        %v1269 = vmul.f32 %v1260, 1.442695
        %v1270 = vpow.pop %v1269
        %v1271 = vmul.f32 %v1261, 1.442695
        %v1272 = vpow.pop %v1271
        %v1273 = vmul.f32 %v1262, 1.442695
        %v1274 = vpow.pop %v1273
        %v1275 = vmul.f32 %v1263, 1.442695
        %v1276 = vpow.pop %v1275
        %v1277 = vmul.f32 %v1264, 1.442695
        %v1278 = vpow.pop %v1277
        %v1279 = vmul.f32 %v1265, 1.442695
        %v1280 = vpow.pop %v1279
        %v1281 = vmul.f32 %v1266, 1.442695
        %v1282 = vpow.pop %v1281
        %v1283 = vadd.f32 %v1268, 1.0
        %v1284 = vadd.f32 %v1270, 1.0
        %v1285 = vadd.f32 %v1272, 1.0
        %v1286 = vadd.f32 %v1274, 1.0
        %v1287 = vadd.f32 %v1276, 1.0
        %v1288 = vadd.f32 %v1278, 1.0
        %v1289 = vadd.f32 %v1280, 1.0
        %v1290 = vadd.f32 %v1282, 1.0
        %v1291 = vrcp.pop %v1283
        %v1292 = vrcp.pop %v1284
        %v1293 = vrcp.pop %v1285
        %v1294 = vrcp.pop %v1286
        %v1295 = vrcp.pop %v1287
        %v1296 = vrcp.pop %v1288
        %v1297 = vrcp.pop %v1289
        %v1298 = vrcp.pop %v1290
        %v1299 = vmul.f32 %v1251, %v1291
        %v1300 = vmul.f32 %v1252, %v1292
        %v1301 = vmul.f32 %v1253, %v1293
        %v1302 = vmul.f32 %v1254, %v1294
        %v1303 = vmul.f32 %v1255, %v1295
        %v1304 = vmul.f32 %v1256, %v1296
        %v1305 = vmul.f32 %v1257, %v1297
        %v1306 = vmul.f32 %v1258, %v1298
        %1307 = vst [vmem:[%s362] sm:$0xff] %v1299
        %1308 = vst [vmem:[%s362 + $0x8] sm:$0xff] %v1300
        %1309 = vst [vmem:[%s362 + $0x10] sm:$0xff] %v1301
        %1310 = vst [vmem:[%s362 + $0x18] sm:$0xff] %v1302
        %1311 = vst [vmem:[%s362 + $0x20] sm:$0xff] %v1303
        %1312 = vst [vmem:[%s362 + $0x28] sm:$0xff] %v1304
        %1313 = vst [vmem:[%s362 + $0x30] sm:$0xff] %v1305
        %1314 = vst [vmem:[%s362 + $0x38] sm:$0xff] %v1306
        %s1315 = sand.u32 %s236, 1
        %s1316 = scalar_lea.sflag [#allocation4], %s1315
        %s1317 = sand.u32 %s236, 1
        %s1318 = smul.addr %s1317, 64
        %s1319 = scalar_lea.vmem [#allocation5], %s1318
        // Predicated region
        $region61: #{tpu_custom_call.1} parent=55 // pred_check
          %p1320 = pneg %p246
        $region62: #{tpu_custom_call.1} parent=55 // pred_check_branch
          %1322 = sbr.rel (%p1320) target = $region64
        $region63: #{tpu_custom_call.1} parent=55 // pred_region
          %s1324 = ssub.s32 1024, 1024
          %1325 = vsyncadd %s1316, %s1324
          %s1326 = smul.addr %s24, 8
          %s1327 = smul.addr %s1326, 128
          %s1328 = scalar_lea.hbm %s9, %s1327
          %s1329 = sshll.u32 %s1319, 4
          %s1330 = int_to_ptr.vmem [resolvable:$true] %s1329
          %1335 = dma.vmem_to_hbm [thread:$0]  %s1330, 1024, %s1328, %s1316, 128, 128, 8
        $region64: #{tpu_custom_call.1} parent=55 // pred_fallthru
          _
      $region56: #{tpu_custom_call.1} parent=5 // pred_fallthru
        _
      %p1336 = scmp.le.s32.totalorder 2, %s19
      // Predicated region
      $region65: #{tpu_custom_call.1} parent=5 // pred_check
        %p1337 = pneg %p1336
      $region66: #{tpu_custom_call.1} parent=5 // pred_check_branch
        %1339 = sbr.rel (%p1337) target = $region68
      $region67: #{tpu_custom_call.1} parent=5 // pred_region
        %s1340 = ssub.s32 %s19, 2
        // Predicated region
        $region69: #{tpu_custom_call.1} parent=67 // pred_check
          %p1341 = pneg %p252
        $region70: #{tpu_custom_call.1} parent=67 // pred_check_branch
          %1343 = sbr.rel (%p1341) target = $region72
        $region71: #{tpu_custom_call.1} parent=67 // pred_region
          %s1344 = sand.u32 %s237, 1
          %s1345 = scalar_lea.sflag [#allocation4], %s1344
          %s1346 = sand.u32 %s237, 1
          %s1347 = smul.addr %s1346, 64
          %s1348 = scalar_lea.vmem [#allocation5], %s1347
          %1349 = dma.done %s1345, 1024
        $region72: #{tpu_custom_call.1} parent=67 // pred_fallthru
          _
      $region68: #{tpu_custom_call.1} parent=5 // pred_fallthru
        _
    $region6: #{tpu_custom_call.1} parent=1 // loop_footer
      %s23 = sadd.s32 1, %s19
    $region7: #{tpu_custom_call.1} parent=1 // loop_footer_branch
      %18 = sbr.rel target = $region3
    $region8: #{tpu_custom_call.1} parent=1 // loop_exit
      _
    %1350 = vsyncpa [#allocation3], 1
    %s1351 = scalar_lea.sflag [#allocation3], 1
    %1352 = vsyncpa %s1351, 1
    %1353 = vsyncpa [#allocation4], 1
    %s1354 = scalar_lea.sflag [#allocation4], 1
    %1355 = vsyncpa %s1354, 1

</llo_original>
